<compile_context>
chip_gen: v7x
topology: tpu7x:2x2x1
jax: 0.10.0
libtpu: 0.0.40
codegen_flags: <defaults>
</compile_context>

<pallas_src>
import functools
import math

import jax
import jax.numpy as jnp
from jax.experimental import pallas as pl
from jax.experimental.pallas import tpu as pltpu


# ----------------------------- Pallas kernel --------------------------------

def arma_layer_kernel(lap_ref, h_ref, x0_ref, w_ref, v_ref, b_ref,
                      out_ref, acc_ref, *, num_stacks):
    """One ARMA layer, grid = (row tiles i, contraction tiles j).

    lap_ref : (tm, tk)           bf16  propagation tile L_hat[i, j]
    h_ref   : (K, tk, F_h)       bf16  hidden-state contraction slab (all stacks)
    x0_ref  : (tm, F_in)         bf16  original node features (row tile)
    w_ref   : (K, F_h, F_out)    bf16
    v_ref   : (K, F_in, F_out)   bf16
    b_ref   : (K, 1, F_out)      f32
    out_ref : (tm, K*F_out)      f32   lane-dense output slab (row tile)
    acc_ref : (tm, K*F_out)      f32   VMEM accumulator scratch
    """
    j = pl.program_id(1)
    nj = pl.num_programs(1)

    @pl.when(j == 0)
    def _init():
        acc_ref[...] = jnp.zeros_like(acc_ref)

    # Lane-dense HW slab for this contraction tile: [H_1 W_1 | ... | H_K W_K].
    # (O(tk*F) work -- negligible vs. the tm*tk propagation matmul, so it is
    #  recomputed per tile; caching across row tiles would be unsafe under
    #  megacore sharding of the parallel axis.)
    h = h_ref[...]                                                   # (K, tk, F_h)
    w = w_ref[...]                                                   # (K, F_h, F_out)
    hw_parts = [
        jnp.dot(h[k], w[k], preferred_element_type=jnp.float32)
        for k in range(num_stacks)
    ]
    hw = jnp.concatenate(hw_parts, axis=-1).astype(lap_ref.dtype)    # (tk, K*F_out)

    # Single wide MXU matmul for all K stacks; accumulate in f32.
    acc_ref[...] += jnp.dot(lap_ref[...], hw,
                            preferred_element_type=jnp.float32)

    @pl.when(j == nj - 1)
    def _finalize():
        x0 = x0_ref[...]                                             # (tm, F_in)
        v = v_ref[...]                                               # (K, F_in, F_out)
        b = b_ref[...]                                               # (K, 1, F_out)
        skip_parts = [
            jnp.dot(x0, v[k], preferred_element_type=jnp.float32) + b[k]
            for k in range(num_stacks)
        ]
        skip = jnp.concatenate(skip_parts, axis=-1)                  # (tm, K*F_out)
        out_ref[...] = jnp.maximum(acc_ref[...] + skip, 0.0).astype(out_ref.dtype)


def _pick_tile(n, pref):
    """Largest divisor of n that is <= pref and a multiple of 8 (or n itself)."""
    if n <= pref:
        return n
    for t in range(min(pref, n), 7, -1):
        if n % t == 0 and t % 8 == 0:
            return t
    return n


def arma_layer(lap, h, x0, w, v, b, *, tm=512, tk=512):
    """One ARMA layer for all K stacks -> (N, K*F_out) lane-dense f32 slab."""
    K, N, F_h = h.shape
    F_in = x0.shape[1]
    F_out = w.shape[-1]
    tm = _pick_tile(N, tm)
    tk = _pick_tile(N, tk)
    n_i, n_j = N // tm, N // tk

    cost = pl.CostEstimate(
        flops=(2 * N * N * K * F_out            # L_hat @ HW slab
               + 2 * N * F_h * K * F_out        # H W
               + 2 * N * F_in * K * F_out),     # X0 V
        transcendentals=0,
        bytes_accessed=(N * N * lap.dtype.itemsize
                        + n_i * K * N * F_h * h.dtype.itemsize
                        + N * F_in * x0.dtype.itemsize
                        + N * K * F_out * 4),
    )

    return pl.pallas_call(
        functools.partial(arma_layer_kernel, num_stacks=K),
        out_shape=jax.ShapeDtypeStruct((N, K * F_out), jnp.float32),
        grid_spec=pltpu.PrefetchScalarGridSpec(
            num_scalar_prefetch=0,
            grid=(n_i, n_j),                     # rows parallel, contraction last
            in_specs=[
                pl.BlockSpec((tm, tk), lambda i, j: (i, j)),             # lap tile
                pl.BlockSpec((K, tk, F_h), lambda i, j: (0, j, 0)),      # H slab
                pl.BlockSpec((tm, F_in), lambda i, j: (i, 0)),           # X0 rows
                pl.BlockSpec((K, F_h, F_out), lambda i, j: (0, 0, 0)),   # W
                pl.BlockSpec((K, F_in, F_out), lambda i, j: (0, 0, 0)),  # V
                pl.BlockSpec((K, 1, F_out), lambda i, j: (0, 0, 0)),     # bias
            ],
            out_specs=pl.BlockSpec((tm, K * F_out), lambda i, j: (i, 0)),
            scratch_shapes=[pltpu.VMEM((tm, K * F_out), jnp.float32)],
        ),
        compiler_params=pltpu.CompilerParams(
            dimension_semantics=("parallel", "arbitrary")),
        cost_estimate=cost,
    )(lap, h, x0, w, v, b)


# ----------------------------- glue / wrapper --------------------------------

def glorot_init(key, shape):
    fan_in, fan_out = shape[-2], shape[-1]
    stdv = math.sqrt(6.0 / (fan_in + fan_out))
    return jax.random.uniform(key, shape, jnp.float32, minval=-stdv, maxval=stdv)


def init_arma_params(key, in_channels, out_channels, num_stacks, num_layers,
                     shared_weights=False):
    K, T, F_in, F_out = num_stacks, num_layers, in_channels, out_channels
    keys = jax.random.split(key, 2 * T + 2)
    ws = [glorot_init(keys[0], (K, F_in, F_out))]
    n_extra_w = (min(1, T - 1) if shared_weights else T - 1)
    for i in range(n_extra_w):
        ws.append(glorot_init(keys[1 + i], (K, F_out, F_out)))
    vs = []
    n_v = 1 if shared_weights else T
    for i in range(n_v):
        vs.append(glorot_init(keys[T + i], (K, F_in, F_out)))
    bs = [jnp.zeros((K, 1, F_out), jnp.float32) for _ in range(n_v)]
    return ws, vs, bs


def build_dense_laplacian(x, edge_index, edge_weight=None):
    """Dense D^-1/2 A D^-1/2 built from the edge list, matching the module's
    scatter_add propagation (deg from the row index, duplicates accumulate)."""
    N = x.shape[0]
    row, col = edge_index[0], edge_index[1]
    if edge_weight is None:
        edge_weight = jnp.ones((edge_index.shape[1],), x.dtype)
    deg = jnp.zeros((N,), x.dtype).at[row].add(edge_weight)        # scatter_add
    deg_inv = jnp.where(deg > 0, deg ** -0.5, 0.0)                 # inf -> 0
    lap_vals = deg_inv[row] * edge_weight * deg_inv[col]
    lap = jnp.zeros((N, N), x.dtype).at[row, col].add(lap_vals)
    return lap


def arma_conv_forward(x, edge_index, ws, vs, bs, num_stacks, num_layers,
                      shared_weights=False, edge_weight=None,
                      tm=512, tk=512, compute_dtype=jnp.bfloat16):
    # TODO(synk): dropout on the skip connection (default p=0 / eval mode) is a no-op here.
    # TODO(synk): fusing the T-layer loop (keeping L_hat / H resident in VMEM across
    #             layers) would cut HBM traffic ~T-fold for the N^2 term, but needs a
    #             full-layer barrier between row tiles; layers are separate pallas_calls.
    K = num_stacks
    N, F_in = x.shape
    lap = build_dense_laplacian(x, edge_index, edge_weight)
    lap_c = lap.astype(compute_dtype)
    x0_c = x.astype(compute_dtype)
    h_c = jnp.broadcast_to(x[None], (K, N, F_in)).astype(compute_dtype)
    h_f32 = None
    for t in range(num_layers):
        w = ws[min(t, 1) if shared_weights else t].astype(compute_dtype)
        v = vs[0 if shared_weights else t].astype(compute_dtype)
        b = bs[0 if shared_weights else t]                            # f32 bias
        F_out = w.shape[-1]
        slab = arma_layer(lap_c, h_c, x0_c, w, v, b, tm=tm, tk=tk)    # (N, K*F_out) f32
        h_f32 = slab.reshape(N, K, F_out).transpose(1, 0, 2)          # (K, N, F_out)
        h_c = h_f32.astype(compute_dtype)
    return h_f32.mean(axis=0)                                         # mean over K stacks


# pure-JAX reference (mirrors the kernel's bf16-input / f32-accumulate casts)
def arma_conv_reference(x, edge_index, ws, vs, bs, num_stacks, num_layers,
                        shared_weights=False, edge_weight=None,
                        compute_dtype=jnp.bfloat16):
    K = num_stacks
    lap = build_dense_laplacian(x, edge_index, edge_weight).astype(compute_dtype)
    x0 = x.astype(compute_dtype)
    h = jnp.broadcast_to(x[None], (K,) + x.shape).astype(compute_dtype)
    h_f32 = None
    for t in range(num_layers):
        w = ws[min(t, 1) if shared_weights else t].astype(compute_dtype)
        v = vs[0 if shared_weights else t].astype(compute_dtype)
        b = bs[0 if shared_weights else t]
        hw = jnp.einsum('knf,kfo->kno', h, w,
                        preferred_element_type=jnp.float32).astype(compute_dtype)
        prop = jnp.einsum('ij,kjo->kio', lap, hw,
                          preferred_element_type=jnp.float32)
        skip = jnp.einsum('nf,kfo->kno', x0, v,
                          preferred_element_type=jnp.float32)
        h_f32 = jax.nn.relu(prop + skip + b)
        h = h_f32.astype(compute_dtype)
    return h_f32.mean(axis=0)


# ---------------------------------- main -------------------------------------

if __name__ == "__main__":
    N, F_in, F_out = 256, 4, 8       # nodes, in_channels, out_channels
    K, T = 2, 2                      # num_stacks, num_layers
    E = 1024                         # number of edges

    key = jax.random.PRNGKey(0)
    kx, ke, kp = jax.random.split(key, 3)

    x = jax.random.normal(kx, (N, F_in), jnp.float32)
    edge_index = jax.random.randint(ke, (2, E), 0, N, jnp.int32)

    ws, vs, bs = init_arma_params(kp, F_in, F_out, K, T, shared_weights=False)

    # tm=tk=128 at N=256 exercises the tiled (rows x contraction) grid.
    out = arma_conv_forward(x, edge_index, ws, vs, bs, K, T,
                            shared_weights=False, tm=128, tk=128)
    out = jax.block_until_ready(out)

    ref = arma_conv_reference(x, edge_index, ws, vs, bs, K, T,
                              shared_weights=False)
    assert out.shape == (N, F_out)
    assert jnp.allclose(out, ref, atol=1e-2, rtol=1e-2), "mismatch vs reference"

    print("KERNEL_OK")
</pallas_src>

<mosaic_0001>
module attributes {stable_mosaic.version = 11 : i64} {
  func.func @arma_layer_kernel(%arg0: i32, %arg1: i32, %arg2: memref<128x128xbf16, #tpu.memory_space<vmem>>, %arg3: memref<2x128x4xbf16, #tpu.memory_space<vmem>>, %arg4: memref<128x4xbf16, #tpu.memory_space<vmem>>, %arg5: memref<2x4x8xbf16, #tpu.memory_space<vmem>>, %arg6: memref<2x4x8xbf16, #tpu.memory_space<vmem>>, %arg7: memref<2x1x8xf32, #tpu.memory_space<vmem>>, %arg8: memref<128x16xf32, #tpu.memory_space<vmem>>, %arg9: memref<128x16xf32, #tpu.memory_space<vmem>>) attributes {dimension_semantics = [#tpu.dimension_semantics<parallel>, #tpu.dimension_semantics<arbitrary>], iteration_bounds = array<i64: 2, 2>, scalar_prefetch = 0 : i64, scratch_operands = 1 : i64, tpu.core_type = #tpu.core_type<tc>, window_params = [{transform_indices = @transform_0, window_bounds = array<i64: 128, 128>}, {transform_indices = @transform_1, window_bounds = array<i64: 2, 128, 4>}, {transform_indices = @transform_2, window_bounds = array<i64: 128, 4>}, {pipeline_mode = #tpu.pipeline_mode<synchronous>, transform_indices = @transform_3, window_bounds = array<i64: 2, 4, 8>}, {pipeline_mode = #tpu.pipeline_mode<synchronous>, transform_indices = @transform_4, window_bounds = array<i64: 2, 4, 8>}, {pipeline_mode = #tpu.pipeline_mode<synchronous>, transform_indices = @transform_5, window_bounds = array<i64: 2, 1, 8>}, {transform_indices = @transform_6, window_bounds = array<i64: 128, 16>}]} {
    %c0_i32 = arith.constant 0 : i32
    %0 = arith.cmpi eq, %arg1, %c0_i32 : i32
    %1 = arith.extui %0 : i1 to i32
    %c0_i32_0 = arith.constant 0 : i32
    %2 = arith.cmpi ne, %1, %c0_i32_0 : i32
    scf.if %2 {
      %cst_15 = arith.constant 0.000000e+00 : f32
      %25 = vector.broadcast %cst_15 : f32 to vector<128x16xf32>
      %c0_16 = arith.constant 0 : index
      %c0_17 = arith.constant 0 : index
      %26 = vector.load %arg9[%c0_16, %c0_17] : memref<128x16xf32, #tpu.memory_space<vmem>>, vector<128x16xf32>
      tpu.vector_store %arg9[%c0_16, %c0_17], %25 {strides = array<i32>} : memref<128x16xf32, #tpu.memory_space<vmem>>, vector<128x16xf32>,
    } else {
    }
    %c0 = arith.constant 0 : index
    %c0_1 = arith.constant 0 : index
    %c0_2 = arith.constant 0 : index
    %3 = vector.load %arg3[%c0, %c0_1, %c0_2] : memref<2x128x4xbf16, #tpu.memory_space<vmem>>, vector<2x128x4xbf16>
    %c0_3 = arith.constant 0 : index
    %c0_4 = arith.constant 0 : index
    %c0_5 = arith.constant 0 : index
    %4 = vector.load %arg5[%c0_3, %c0_4, %c0_5] : memref<2x4x8xbf16, #tpu.memory_space<vmem>>, vector<2x4x8xbf16>
    %5 = vector.extract_strided_slice %3 {offsets = [0, 0, 0], sizes = [1, 128, 4], strides = [1, 1, 1]} : vector<2x128x4xbf16> to vector<1x128x4xbf16>
    %6 = vector.shape_cast %5 : vector<1x128x4xbf16> to vector<128x4xbf16>
    %7 = vector.extract_strided_slice %4 {offsets = [0, 0, 0], sizes = [1, 4, 8], strides = [1, 1, 1]} : vector<2x4x8xbf16> to vector<1x4x8xbf16>
    %8 = vector.shape_cast %7 : vector<1x4x8xbf16> to vector<4x8xbf16>
    %cst = arith.constant dense<0.000000e+00> : vector<128x8xf32>
    %9 = tpu.matmul %6, %8, %cst {dimension_numbers = #tpu.dot_dimension_numbers<[1], [0], [0], [1], [0, 0, 1, 1], [], []>} : vector<128x4xbf16>, vector<4x8xbf16>, vector<128x8xf32> -> vector<128x8xf32>
    %10 = vector.extract_strided_slice %3 {offsets = [1, 0, 0], sizes = [1, 128, 4], strides = [1, 1, 1]} : vector<2x128x4xbf16> to vector<1x128x4xbf16>
    %11 = vector.shape_cast %10 : vector<1x128x4xbf16> to vector<128x4xbf16>
    %12 = vector.extract_strided_slice %4 {offsets = [1, 0, 0], sizes = [1, 4, 8], strides = [1, 1, 1]} : vector<2x4x8xbf16> to vector<1x4x8xbf16>
    %13 = vector.shape_cast %12 : vector<1x4x8xbf16> to vector<4x8xbf16>
    %cst_6 = arith.constant dense<0.000000e+00> : vector<128x8xf32>
    %14 = tpu.matmul %11, %13, %cst_6 {dimension_numbers = #tpu.dot_dimension_numbers<[1], [0], [0], [1], [0, 0, 1, 1], [], []>} : vector<128x4xbf16>, vector<4x8xbf16>, vector<128x8xf32> -> vector<128x8xf32>
    %15 = tpu.concatenate %9, %14 in 1 : vector<128x8xf32>, vector<128x8xf32> -> vector<128x16xf32>
    %16 = arith.truncf %15 : vector<128x16xf32> to vector<128x16xbf16>
    %c0_7 = arith.constant 0 : index
    %c0_8 = arith.constant 0 : index
    %17 = vector.load %arg9[%c0_7, %c0_8] : memref<128x16xf32, #tpu.memory_space<vmem>>, vector<128x16xf32>
    %c0_9 = arith.constant 0 : index
    %c0_10 = arith.constant 0 : index
    %18 = vector.load %arg2[%c0_9, %c0_10] : memref<128x128xbf16, #tpu.memory_space<vmem>>, vector<128x128xbf16>
    %cst_11 = arith.constant dense<0.000000e+00> : vector<128x16xf32>
    %19 = tpu.matmul %18, %16, %cst_11 {dimension_numbers = #tpu.dot_dimension_numbers<[1], [0], [0], [1], [0, 0, 1, 1], [], []>} : vector<128x128xbf16>, vector<128x16xbf16>, vector<128x16xf32> -> vector<128x16xf32>
    %20 = arith.addf %17, %19 : vector<128x16xf32>
    %c0_12 = arith.constant 0 : index
    %c0_13 = arith.constant 0 : index
    %21 = vector.load %arg9[%c0_12, %c0_13] : memref<128x16xf32, #tpu.memory_space<vmem>>, vector<128x16xf32>
    tpu.vector_store %arg9[%c0_12, %c0_13], %20 {strides = array<i32>} : memref<128x16xf32, #tpu.memory_space<vmem>>, vector<128x16xf32>,
    %c1_i32 = arith.constant 1 : i32
    %22 = arith.cmpi eq, %arg1, %c1_i32 : i32
    %23 = arith.extui %22 : i1 to i32
    %c0_i32_14 = arith.constant 0 : i32
    %24 = arith.cmpi ne, %23, %c0_i32_14 : i32
    scf.if %24 {
      %c0_15 = arith.constant 0 : index
      %c0_16 = arith.constant 0 : index
      %25 = vector.load %arg4[%c0_15, %c0_16] : memref<128x4xbf16, #tpu.memory_space<vmem>>, vector<128x4xbf16>
      %c0_17 = arith.constant 0 : index
      %c0_18 = arith.constant 0 : index
      %c0_19 = arith.constant 0 : index
      %26 = vector.load %arg6[%c0_17, %c0_18, %c0_19] : memref<2x4x8xbf16, #tpu.memory_space<vmem>>, vector<2x4x8xbf16>
      %c0_20 = arith.constant 0 : index
      %c0_21 = arith.constant 0 : index
      %c0_22 = arith.constant 0 : index
      %27 = vector.load %arg7[%c0_20, %c0_21, %c0_22] : memref<2x1x8xf32, #tpu.memory_space<vmem>>, vector<2x1x8xf32>
      %28 = vector.extract_strided_slice %26 {offsets = [0, 0, 0], sizes = [1, 4, 8], strides = [1, 1, 1]} : vector<2x4x8xbf16> to vector<1x4x8xbf16>
      %29 = vector.shape_cast %28 : vector<1x4x8xbf16> to vector<4x8xbf16>
      %cst_23 = arith.constant dense<0.000000e+00> : vector<128x8xf32>
      %30 = tpu.matmul %25, %29, %cst_23 {dimension_numbers = #tpu.dot_dimension_numbers<[1], [0], [0], [1], [0, 0, 1, 1], [], []>} : vector<128x4xbf16>, vector<4x8xbf16>, vector<128x8xf32> -> vector<128x8xf32>
      %31 = vector.extract_strided_slice %27 {offsets = [0, 0, 0], sizes = [1, 1, 8], strides = [1, 1, 1]} : vector<2x1x8xf32> to vector<1x1x8xf32>
      %32 = vector.shape_cast %31 : vector<1x1x8xf32> to vector<1x8xf32>
      %33 = vector.broadcast %32 : vector<1x8xf32> to vector<128x8xf32>
      %34 = arith.addf %30, %33 : vector<128x8xf32>
      %35 = vector.extract_strided_slice %26 {offsets = [1, 0, 0], sizes = [1, 4, 8], strides = [1, 1, 1]} : vector<2x4x8xbf16> to vector<1x4x8xbf16>
      %36 = vector.shape_cast %35 : vector<1x4x8xbf16> to vector<4x8xbf16>
      %cst_24 = arith.constant dense<0.000000e+00> : vector<128x8xf32>
      %37 = tpu.matmul %25, %36, %cst_24 {dimension_numbers = #tpu.dot_dimension_numbers<[1], [0], [0], [1], [0, 0, 1, 1], [], []>} : vector<128x4xbf16>, vector<4x8xbf16>, vector<128x8xf32> -> vector<128x8xf32>
      %38 = vector.extract_strided_slice %27 {offsets = [1, 0, 0], sizes = [1, 1, 8], strides = [1, 1, 1]} : vector<2x1x8xf32> to vector<1x1x8xf32>
      %39 = vector.shape_cast %38 : vector<1x1x8xf32> to vector<1x8xf32>
      %40 = vector.broadcast %39 : vector<1x8xf32> to vector<128x8xf32>
      %41 = arith.addf %37, %40 : vector<128x8xf32>
      %42 = tpu.concatenate %34, %41 in 1 : vector<128x8xf32>, vector<128x8xf32> -> vector<128x16xf32>
      %c0_25 = arith.constant 0 : index
      %c0_26 = arith.constant 0 : index
      %43 = vector.load %arg9[%c0_25, %c0_26] : memref<128x16xf32, #tpu.memory_space<vmem>>, vector<128x16xf32>
      %44 = arith.addf %43, %42 : vector<128x16xf32>
      %cst_27 = arith.constant 0.000000e+00 : f32
      %45 = vector.broadcast %cst_27 : f32 to vector<128x16xf32>
      %46 = arith.maximumf %44, %45 : vector<128x16xf32>
      %c0_28 = arith.constant 0 : index
      %c0_29 = arith.constant 0 : index
      %47 = vector.load %arg8[%c0_28, %c0_29] : memref<128x16xf32, #tpu.memory_space<vmem>>, vector<128x16xf32>
      tpu.vector_store %arg8[%c0_28, %c0_29], %46 {strides = array<i32>} : memref<128x16xf32, #tpu.memory_space<vmem>>, vector<128x16xf32>,
    } else {
    }
    return
  }
  func.func @transform_0(%arg0: i32, %arg1: i32) -> (i32, i32) {
    %c0_i32 = arith.constant 0 : i32
    return %arg0, %arg1 : i32, i32
  }
  func.func @transform_1(%arg0: i32, %arg1: i32) -> (i32, i32, i32) {
    %c0_i32 = arith.constant 0 : i32
    %c0_i32_0 = arith.constant 0 : i32
    %c0_i32_1 = arith.constant 0 : i32
    return %c0_i32, %arg1, %c0_i32_0 : i32, i32, i32
  }
  func.func @transform_2(%arg0: i32, %arg1: i32) -> (i32, i32) {
    %c0_i32 = arith.constant 0 : i32
    %c0_i32_0 = arith.constant 0 : i32
    return %arg0, %c0_i32 : i32, i32
  }
  func.func @transform_3(%arg0: i32, %arg1: i32) -> (i32, i32, i32) {
    %c0_i32 = arith.constant 0 : i32
    %c0_i32_0 = arith.constant 0 : i32
    %c0_i32_1 = arith.constant 0 : i32
    %c0_i32_2 = arith.constant 0 : i32
    return %c0_i32, %c0_i32_0, %c0_i32_1 : i32, i32, i32
  }
  func.func @transform_4(%arg0: i32, %arg1: i32) -> (i32, i32, i32) {
    %c0_i32 = arith.constant 0 : i32
    %c0_i32_0 = arith.constant 0 : i32
    %c0_i32_1 = arith.constant 0 : i32
    %c0_i32_2 = arith.constant 0 : i32
    return %c0_i32, %c0_i32_0, %c0_i32_1 : i32, i32, i32
  }
  func.func @transform_5(%arg0: i32, %arg1: i32) -> (i32, i32, i32) {
    %c0_i32 = arith.constant 0 : i32
    %c0_i32_0 = arith.constant 0 : i32
    %c0_i32_1 = arith.constant 0 : i32
    %c0_i32_2 = arith.constant 0 : i32
    return %c0_i32, %c0_i32_0, %c0_i32_1 : i32, i32, i32
  }
  func.func @transform_6(%arg0: i32, %arg1: i32) -> (i32, i32) {
    %c0_i32 = arith.constant 0 : i32
    %c0_i32_0 = arith.constant 0 : i32
    return %arg0, %c0_i32 : i32, i32
  }
}

</mosaic_0001>

<llo_original>
// kernel: tpu_custom_call.1
$region0: #{tpu_custom_call.1}
  #allocation0 [shape = 'u32[]', space=smem, size = 0x4, offset = 0x4, fixed_abs, tag = 'smem constant byte address 0x4 - core index']
  #allocation1 [shape = 'u32[144,128]{1,0:T(1,128)}', space=vmem, size = 0x12000, scoped, tag = 'internal scratch']
  #allocation2 [shape = 'f32[128,16]{1,0:T(8,128)}', space=vmem, size = 0x10000, scoped, tag = 'scratch operand']
  %s0 = inlined_call_operand.vmem [shape: bf16[256,256], index: 0, kind: input, shape index: {}]
  %s1 = inlined_call_operand.vmem [shape: bf16[2,256,4], index: 1, kind: input, shape index: {}]
  %s2 = inlined_call_operand.vmem [shape: bf16[256,4], index: 2, kind: input, shape index: {}]
  %s3 = inlined_call_operand.vmem [shape: bf16[2,4,8], index: 3, kind: input, shape index: {}]
  %s4 = inlined_call_operand.vmem [shape: bf16[2,4,8], index: 4, kind: input, shape index: {}]
  %s5 = inlined_call_operand.vmem [shape: f32[2,1,8], index: 5, kind: input, shape index: {}]
  %s6 = inlined_call_operand.vmem [shape: f32[256,16], index: 6, kind: output, shape index: {}]
  %s7 = sld [smem:[#allocation0]]
  $region147: #{tpu_custom_call.1} parent=0
    _
  %s9 = ssub.s32 1, %s7
  %s10 = scalar_select 0, %s9, %s7
  $region1: #{tpu_custom_call.1} parent=0
    #allocation3 [shape = 'u8[65536]{0}', space=vmem, size = 0x10000, scoped, tag = 'input window, operand 0']
    #allocation4 [shape = 'u8[131072]{0}', space=vmem, size = 0x20000, scoped, tag = 'input window, operand 1']
    loop: start=0, step=1, limit=6
    $region2: #{tpu_custom_call.1} parent=1 // loop_pre_header
      _
    $region3: #{tpu_custom_call.1} parent=1 // loop_header
      %s12 = sphi 0, %s16
      %p13 = scmp.ge.s32.totalorder %s12, 6
      %s19 = sphi 0, %s31
      %s20 = sphi 0, %s27
      %s21 = sphi 0, %s19
      %s22 = sphi 0, %s20
      %s23 = sphi 0, %s21
      %s24 = sphi 0, %s22
      %s36 = sphi 0, %s38
      %s39 = sphi 0, %s36
      %s40 = sphi 0, %s39
      %s56 = sphi 0, %s40
      %s62 = sphi 0, %s64
      %s65 = sphi 0, %s62
      %s66 = sphi 0, %s65
      %s82 = sphi 0, %s66
      %s88 = sphi 0, %s90
      %s91 = sphi 0, %s88
      %s92 = sphi 0, %s91
      %s108 = sphi 0, %s92
      %s112 = sphi 0, %s112
      %s114 = sphi 0, %s112
      %s115 = sphi 0, %s114
      %s129 = sphi 0, %s115
      %s133 = sphi 0, %s133
      %s135 = sphi 0, %s133
      %s136 = sphi 0, %s135
      %s150 = sphi 0, %s136
      %s154 = sphi 0, %s154
      %s156 = sphi 0, %s154
      %s157 = sphi 0, %s156
      %s171 = sphi 0, %s157
      %s177 = sphi 0, %s179
      %s180 = sphi 0, %s177
      %s181 = sphi 0, %s180
      %s197 = sphi 0, %s181
    $region4: #{tpu_custom_call.1} parent=1 // loop_header_branch
      %15 = sbr.rel (%p13) target = $region8
    $region5: #{tpu_custom_call.1} parent=1 // loop_body
      %s17 = ssub.s32 %s12, 1
      %s18 = ssub.s32 %s12, 2
      %s25 = sadd.s32 1, %s20
      %p26 = scmp.ge.s32.totalorder %s25, 2
      %s27 = scalar_select %p26, 0, %s25
      %s28 = sadd.s32 1, %s19
      %s29 = scalar_select %p26, %s28, %s19
      %p30 = scmp.ge.s32.totalorder %s29, 2
      %s31 = scalar_select %p30, 0, %s29
      %s32 = ssub.s32 %s19, %s31
      %s33 = ssub.s32 %s20, %s27
      %s34 = sor.u32 %s32, %s33
      %p35 = scmp.eq.s32.totalorder %s34, 0
      %s37 = sadd.s32 %s36, 1
      %s38 = scalar_select %p35, %s36, %s37
      %p41 = pneg %p35
      %p42 = scmp.eq.s32.totalorder %s12, 3
      %p43 = por %p41, %p42
      %p44 = scmp.ne.s32.totalorder %s36, %s39
      %p45 = scmp.eq.s32.totalorder %s12, 0
      %p46 = por %p44, %p45
      %p47 = scmp.ne.s32.totalorder %s36, %s39
      %p48 = scmp.eq.s32.totalorder %s17, 3
      %p49 = por %p47, %p48
      %p50 = scmp.ne.s32.totalorder %s39, %s40
      %p51 = scmp.eq.s32.totalorder %s17, 0
      %p52 = por %p50, %p51
      %p53 = scmp.ne.s32.totalorder %s39, %s40
      %p54 = scmp.eq.s32.totalorder %s18, 3
      %p55 = por %p53, %p54
      %p57 = scmp.ne.s32.totalorder %s40, %s56
      %p58 = scmp.eq.s32.totalorder %s18, 0
      %p59 = por %p57, %p58
      %s60 = ssub.s32 %s20, %s27
      %p61 = scmp.eq.s32.totalorder %s60, 0
      %s63 = sadd.s32 %s62, 1
      %s64 = scalar_select %p61, %s62, %s63
      %p67 = pneg %p61
      %p68 = scmp.eq.s32.totalorder %s12, 3
      %p69 = por %p67, %p68
      %p70 = scmp.ne.s32.totalorder %s62, %s65
      %p71 = scmp.eq.s32.totalorder %s12, 0
      %p72 = por %p70, %p71
      %p73 = scmp.ne.s32.totalorder %s62, %s65
      %p74 = scmp.eq.s32.totalorder %s17, 3
      %p75 = por %p73, %p74
      %p76 = scmp.ne.s32.totalorder %s65, %s66
      %p77 = scmp.eq.s32.totalorder %s17, 0
      %p78 = por %p76, %p77
      %p79 = scmp.ne.s32.totalorder %s65, %s66
      %p80 = scmp.eq.s32.totalorder %s18, 3
      %p81 = por %p79, %p80
      %p83 = scmp.ne.s32.totalorder %s66, %s82
      %p84 = scmp.eq.s32.totalorder %s18, 0
      %p85 = por %p83, %p84
      %s86 = ssub.s32 %s19, %s31
      %p87 = scmp.eq.s32.totalorder %s86, 0
      %s89 = sadd.s32 %s88, 1
      %s90 = scalar_select %p87, %s88, %s89
      %p93 = pneg %p87
      %p94 = scmp.eq.s32.totalorder %s12, 3
      %p95 = por %p93, %p94
      %p96 = scmp.ne.s32.totalorder %s88, %s91
      %p97 = scmp.eq.s32.totalorder %s12, 0
      %p98 = por %p96, %p97
      %p99 = scmp.ne.s32.totalorder %s88, %s91
      %p100 = scmp.eq.s32.totalorder %s17, 3
      %p101 = por %p99, %p100
      %p102 = scmp.ne.s32.totalorder %s91, %s92
      %p103 = scmp.eq.s32.totalorder %s17, 0
      %p104 = por %p102, %p103
      %p105 = scmp.ne.s32.totalorder %s91, %s92
      %p106 = scmp.eq.s32.totalorder %s18, 3
      %p107 = por %p105, %p106
      %p109 = scmp.ne.s32.totalorder %s92, %s108
      %p110 = scmp.eq.s32.totalorder %s18, 0
      %p111 = por %p109, %p110
      %s113 = sadd.s32 %s112, 1
      %p116 = scmp.eq.s32.totalorder %s12, 3
      %p117 = scmp.ne.s32.totalorder %s112, %s114
      %p118 = scmp.eq.s32.totalorder %s12, 0
      %p119 = por %p117, %p118
      %p120 = scmp.ne.s32.totalorder %s112, %s114
      %p121 = scmp.eq.s32.totalorder %s17, 3
      %p122 = por %p120, %p121
      %p123 = scmp.ne.s32.totalorder %s114, %s115
      %p124 = scmp.eq.s32.totalorder %s17, 0
      %p125 = por %p123, %p124
      %p126 = scmp.ne.s32.totalorder %s114, %s115
      %p127 = scmp.eq.s32.totalorder %s18, 3
      %p128 = por %p126, %p127
      %p130 = scmp.ne.s32.totalorder %s115, %s129
      %p131 = scmp.eq.s32.totalorder %s18, 0
      %p132 = por %p130, %p131
      %s134 = sadd.s32 %s133, 1
      %p137 = scmp.eq.s32.totalorder %s12, 3
      %p138 = scmp.ne.s32.totalorder %s133, %s135
      %p139 = scmp.eq.s32.totalorder %s12, 0
      %p140 = por %p138, %p139
      %p141 = scmp.ne.s32.totalorder %s133, %s135
      %p142 = scmp.eq.s32.totalorder %s17, 3
      %p143 = por %p141, %p142
      %p144 = scmp.ne.s32.totalorder %s135, %s136
      %p145 = scmp.eq.s32.totalorder %s17, 0
      %p146 = por %p144, %p145
      %p147 = scmp.ne.s32.totalorder %s135, %s136
      %p148 = scmp.eq.s32.totalorder %s18, 3
      %p149 = por %p147, %p148
      %p151 = scmp.ne.s32.totalorder %s136, %s150
      %p152 = scmp.eq.s32.totalorder %s18, 0
      %p153 = por %p151, %p152
      %s155 = sadd.s32 %s154, 1
      %p158 = scmp.eq.s32.totalorder %s12, 3
      %p159 = scmp.ne.s32.totalorder %s154, %s156
      %p160 = scmp.eq.s32.totalorder %s12, 0
      %p161 = por %p159, %p160
      %p162 = scmp.ne.s32.totalorder %s154, %s156
      %p163 = scmp.eq.s32.totalorder %s17, 3
      %p164 = por %p162, %p163
      %p165 = scmp.ne.s32.totalorder %s156, %s157
      %p166 = scmp.eq.s32.totalorder %s17, 0
      %p167 = por %p165, %p166
      %p168 = scmp.ne.s32.totalorder %s156, %s157
      %p169 = scmp.eq.s32.totalorder %s18, 3
      %p170 = por %p168, %p169
      %p172 = scmp.ne.s32.totalorder %s157, %s171
      %p173 = scmp.eq.s32.totalorder %s18, 0
      %p174 = por %p172, %p173
      %s175 = ssub.s32 %s19, %s31
      %p176 = scmp.eq.s32.totalorder %s175, 0
      %s178 = sadd.s32 %s177, 1
      %s179 = scalar_select %p176, %s177, %s178
      %p182 = pneg %p176
      %p183 = scmp.eq.s32.totalorder %s12, 3
      %p184 = por %p182, %p183
      %p185 = scmp.ne.s32.totalorder %s177, %s180
      %p186 = scmp.eq.s32.totalorder %s12, 0
      %p187 = por %p185, %p186
      %p188 = scmp.ne.s32.totalorder %s177, %s180
      %p189 = scmp.eq.s32.totalorder %s17, 3
      %p190 = por %p188, %p189
      %p191 = scmp.ne.s32.totalorder %s180, %s181
      %p192 = scmp.eq.s32.totalorder %s17, 0
      %p193 = por %p191, %p192
      %p194 = scmp.ne.s32.totalorder %s180, %s181
      %p195 = scmp.eq.s32.totalorder %s18, 3
      %p196 = por %p194, %p195
      %p198 = scmp.ne.s32.totalorder %s181, %s197
      %p199 = scmp.eq.s32.totalorder %s18, 0
      %p200 = por %p198, %p199
      %p201 = scmp.le.s32.totalorder 1, %s12
      %p202 = scmp.lt.s32.totalorder %s12, 5
      %p203 = pnand %p201, %p202
      %p204 = pneg %p203
      // Predicated region
      $region9: #{tpu_custom_call.1} parent=5 // pred_check
        _
      $region10: #{tpu_custom_call.1} parent=5 // pred_check_branch
        %206 = sbr.rel (%p203) target = $region12
      $region11: #{tpu_custom_call.1} parent=5 // pred_region
        %s207 = ssub.s32 %s12, 1
        // Predicated region
        $region13: #{tpu_custom_call.1} parent=11 // pred_check
          %p208 = pneg %p125
        $region14: #{tpu_custom_call.1} parent=11 // pred_check_branch
          %210 = sbr.rel (%p208) target = $region16
        $region15: #{tpu_custom_call.1} parent=11 // pred_region
          _
        $region16: #{tpu_custom_call.1} parent=11 // pred_fallthru
          _
        // Predicated region
        $region17: #{tpu_custom_call.1} parent=11 // pred_check
          %p211 = pneg %p146
        $region18: #{tpu_custom_call.1} parent=11 // pred_check_branch
          %213 = sbr.rel (%p211) target = $region20
        $region19: #{tpu_custom_call.1} parent=11 // pred_region
          _
        $region20: #{tpu_custom_call.1} parent=11 // pred_fallthru
          _
        // Predicated region
        $region21: #{tpu_custom_call.1} parent=11 // pred_check
          %p214 = pneg %p167
        $region22: #{tpu_custom_call.1} parent=11 // pred_check_branch
          %216 = sbr.rel (%p214) target = $region24
        $region23: #{tpu_custom_call.1} parent=11 // pred_region
          _
        $region24: #{tpu_custom_call.1} parent=11 // pred_fallthru
          _
      $region12: #{tpu_custom_call.1} parent=5 // pred_fallthru
        _
      %p217 = scmp.lt.s32.totalorder %s12, 4
      // Predicated region
      $region25: #{tpu_custom_call.1} parent=5 // pred_check
        %p218 = pneg %p217
      $region26: #{tpu_custom_call.1} parent=5 // pred_check_branch
        %220 = sbr.rel (%p218) target = $region28
      $region27: #{tpu_custom_call.1} parent=5 // pred_region
        // Predicated region
        $region29: #{tpu_custom_call.1} parent=27 // pred_check
          %p221 = pneg %p46
        $region30: #{tpu_custom_call.1} parent=27 // pred_check_branch
          %223 = sbr.rel (%p221) target = $region32
        $region31: #{tpu_custom_call.1} parent=27 // pred_region
          %s224 = sand.u32 %s36, 1
          %s225 = sand.u32 %s36, 1
          %s226 = smul.addr %s225, 64
          %s227 = scalar_lea.vmem [#allocation3], %s226
          %s228 = smul.u32 16, %s19
          %s229 = smul.addr %s228, 2
          %s230 = sadd.s32 %s20, %s229
          %s231 = smul.addr %s230, 4
          %s232 = scalar_lea.vmem %s0, %s231
          // Predicated region
          $region33: #{tpu_custom_call.1} parent=31 // pred_check
            _
          $region34: #{tpu_custom_call.1} parent=31 // pred_check_branch
            %234 = sbr.rel (0) target = $region36
          $region35: #{tpu_custom_call.1} parent=31 // pred_region
            // Predicated region
            $region37: #{tpu_custom_call.1} parent=35 // pred_check
              _
            $region38: #{tpu_custom_call.1} parent=35 // pred_check_branch
              %236 = sbr.rel target = $region40
            $region39: #{tpu_custom_call.1} parent=35 // pred_region
              // Predicated region
              $region52: #{tpu_custom_call.1} parent=39 // pred_check
                _
              $region53: #{tpu_custom_call.1} parent=39 // pred_check_branch
                %281 = sbr.rel (0) target = $region55
              $region54: #{tpu_custom_call.1} parent=39 // pred_region
                loop: start=0, step=1, limit=1
                $region56: #{tpu_custom_call.1} parent=54 // loop_pre_header
                  _
                $region57: #{tpu_custom_call.1} parent=54 // loop_header
                  %s283 = sphi 0, %s287
                  %p284 = scmp.ge.s32.totalorder %s283, 1
                  %s288 = sphi %s232, %s232
                  %s289 = sphi %s227, %s227
                $region58: #{tpu_custom_call.1} parent=54 // loop_header_branch
                  %286 = sbr.rel (%p284) target = $region62
                $region59: #{tpu_custom_call.1} parent=54 // loop_body
                  _
                $region60: #{tpu_custom_call.1} parent=54 // loop_footer
                  %s287 = sadd.s32 1, %s283
                $region61: #{tpu_custom_call.1} parent=54 // loop_footer_branch
                  %282 = sbr.rel target = $region57
                $region62: #{tpu_custom_call.1} parent=54 // loop_exit
                  _
                loop: start=0, step=1, limit=1
                $region63: #{tpu_custom_call.1} parent=54 // loop_pre_header
                  _
                $region64: #{tpu_custom_call.1} parent=54 // loop_header
                  %s292 = sphi 0, %s296
                  %p293 = scmp.ge.s32.totalorder %s292, 1
                  %s297 = sphi %s232, %s232
                  %s298 = sphi %s227, %s227
                $region65: #{tpu_custom_call.1} parent=54 // loop_header_branch
                  %295 = sbr.rel (%p293) target = $region69
                $region66: #{tpu_custom_call.1} parent=54 // loop_body
                  %v299 = vld [vmem:[%s297] sm:$0xf]
                  %300 = vst [vmem:[%s298] sm:$0xf] %v299
                  %v301 = vld [vmem:[%s297 + $0x8] sm:$0xf]
                  %302 = vst [vmem:[%s298 + $0x4] sm:$0xf] %v301
                  %v303 = vld [vmem:[%s297 + $0x10] sm:$0xf]
                  %304 = vst [vmem:[%s298 + $0x8] sm:$0xf] %v303
                  %v305 = vld [vmem:[%s297 + $0x18] sm:$0xf]
                  %306 = vst [vmem:[%s298 + $0xc] sm:$0xf] %v305
                  %v307 = vld [vmem:[%s297 + $0x20] sm:$0xf]
                  %308 = vst [vmem:[%s298 + $0x10] sm:$0xf] %v307
                  %v309 = vld [vmem:[%s297 + $0x28] sm:$0xf]
                  %310 = vst [vmem:[%s298 + $0x14] sm:$0xf] %v309
                  %v311 = vld [vmem:[%s297 + $0x30] sm:$0xf]
                  %312 = vst [vmem:[%s298 + $0x18] sm:$0xf] %v311
                  %v313 = vld [vmem:[%s297 + $0x38] sm:$0xf]
                  %314 = vst [vmem:[%s298 + $0x1c] sm:$0xf] %v313
                  %v315 = vld [vmem:[%s297 + $0x40] sm:$0xf]
                  %316 = vst [vmem:[%s298 + $0x20] sm:$0xf] %v315
                  %v317 = vld [vmem:[%s297 + $0x48] sm:$0xf]
                  %318 = vst [vmem:[%s298 + $0x24] sm:$0xf] %v317
                  %v319 = vld [vmem:[%s297 + $0x50] sm:$0xf]
                  %320 = vst [vmem:[%s298 + $0x28] sm:$0xf] %v319
                  %v321 = vld [vmem:[%s297 + $0x58] sm:$0xf]
                  %322 = vst [vmem:[%s298 + $0x2c] sm:$0xf] %v321
                  %v323 = vld [vmem:[%s297 + $0x60] sm:$0xf]
                  %324 = vst [vmem:[%s298 + $0x30] sm:$0xf] %v323
                  %v325 = vld [vmem:[%s297 + $0x68] sm:$0xf]
                  %326 = vst [vmem:[%s298 + $0x34] sm:$0xf] %v325
                  %v327 = vld [vmem:[%s297 + $0x70] sm:$0xf]
                  %328 = vst [vmem:[%s298 + $0x38] sm:$0xf] %v327
                  %v329 = vld [vmem:[%s297 + $0x78] sm:$0xf]
                  %330 = vst [vmem:[%s298 + $0x3c] sm:$0xf] %v329
                $region67: #{tpu_custom_call.1} parent=54 // loop_footer
                  %s296 = sadd.s32 1, %s292
                $region68: #{tpu_custom_call.1} parent=54 // loop_footer_branch
                  %291 = sbr.rel target = $region64
                $region69: #{tpu_custom_call.1} parent=54 // loop_exit
                  _
              $region55: #{tpu_custom_call.1} parent=39 // pred_fallthru
                _
            $region40: #{tpu_custom_call.1} parent=35 // pred_fallthru
              _
            // Predicated region
            $region41: #{tpu_custom_call.1} parent=35 // pred_check
              _
            $region42: #{tpu_custom_call.1} parent=35 // pred_check_branch
              %238 = sbr.rel (0) target = $region44
            $region43: #{tpu_custom_call.1} parent=35 // pred_region
              loop: start=0, step=1, limit=1
              $region45: #{tpu_custom_call.1} parent=43 // loop_pre_header
                _
              $region46: #{tpu_custom_call.1} parent=43 // loop_header
                %s241 = sphi 0, %s245
                %p242 = scmp.ge.s32.totalorder %s241, 1
                %s246 = sphi %s232, %s232
                %s247 = sphi %s227, %s227
              $region47: #{tpu_custom_call.1} parent=43 // loop_header_branch
                %244 = sbr.rel (%p242) target = $region51
              $region48: #{tpu_custom_call.1} parent=43 // loop_body
                %v248 = vld [vmem:[%s246] sm:$0xf]
                %249 = vst [vmem:[%s247] sm:$0xf] %v248
                %v250 = vld [vmem:[%s246 + $0x8] sm:$0xf]
                %251 = vst [vmem:[%s247 + $0x4] sm:$0xf] %v250
                %v252 = vld [vmem:[%s246 + $0x10] sm:$0xf]
                %253 = vst [vmem:[%s247 + $0x8] sm:$0xf] %v252
                %v254 = vld [vmem:[%s246 + $0x18] sm:$0xf]
                %255 = vst [vmem:[%s247 + $0xc] sm:$0xf] %v254
                %v256 = vld [vmem:[%s246 + $0x20] sm:$0xf]
                %257 = vst [vmem:[%s247 + $0x10] sm:$0xf] %v256
                %v258 = vld [vmem:[%s246 + $0x28] sm:$0xf]
                %259 = vst [vmem:[%s247 + $0x14] sm:$0xf] %v258
                %v260 = vld [vmem:[%s246 + $0x30] sm:$0xf]
                %261 = vst [vmem:[%s247 + $0x18] sm:$0xf] %v260
                %v262 = vld [vmem:[%s246 + $0x38] sm:$0xf]
                %263 = vst [vmem:[%s247 + $0x1c] sm:$0xf] %v262
                %v264 = vld [vmem:[%s246 + $0x40] sm:$0xf]
                %265 = vst [vmem:[%s247 + $0x20] sm:$0xf] %v264
                %v266 = vld [vmem:[%s246 + $0x48] sm:$0xf]
                %267 = vst [vmem:[%s247 + $0x24] sm:$0xf] %v266
                %v268 = vld [vmem:[%s246 + $0x50] sm:$0xf]
                %269 = vst [vmem:[%s247 + $0x28] sm:$0xf] %v268
                %v270 = vld [vmem:[%s246 + $0x58] sm:$0xf]
                %271 = vst [vmem:[%s247 + $0x2c] sm:$0xf] %v270
                %v272 = vld [vmem:[%s246 + $0x60] sm:$0xf]
                %273 = vst [vmem:[%s247 + $0x30] sm:$0xf] %v272
                %v274 = vld [vmem:[%s246 + $0x68] sm:$0xf]
                %275 = vst [vmem:[%s247 + $0x34] sm:$0xf] %v274
                %v276 = vld [vmem:[%s246 + $0x70] sm:$0xf]
                %277 = vst [vmem:[%s247 + $0x38] sm:$0xf] %v276
                %v278 = vld [vmem:[%s246 + $0x78] sm:$0xf]
                %279 = vst [vmem:[%s247 + $0x3c] sm:$0xf] %v278
              $region49: #{tpu_custom_call.1} parent=43 // loop_footer
                %s245 = sadd.s32 1, %s241
              $region50: #{tpu_custom_call.1} parent=43 // loop_footer_branch
                %240 = sbr.rel target = $region46
              $region51: #{tpu_custom_call.1} parent=43 // loop_exit
                _
            $region44: #{tpu_custom_call.1} parent=35 // pred_fallthru
              _
          $region36: #{tpu_custom_call.1} parent=31 // pred_fallthru
            _
          %331 = vnop
        $region32: #{tpu_custom_call.1} parent=27 // pred_fallthru
          _
        // Predicated region
        $region70: #{tpu_custom_call.1} parent=27 // pred_check
          %p332 = pneg %p72
        $region71: #{tpu_custom_call.1} parent=27 // pred_check_branch
          %334 = sbr.rel (%p332) target = $region73
        $region72: #{tpu_custom_call.1} parent=27 // pred_region
          %s335 = sand.u32 %s62, 1
          %s336 = sand.u32 %s62, 1
          %s337 = smul.addr %s336, 128
          %s338 = scalar_lea.vmem [#allocation4], %s337
          %s339 = smul.u32 16, %s20
          %s340 = smul.addr %s339, 4
          %s341 = scalar_lea.vmem %s1, %s340
          // Predicated region
          $region74: #{tpu_custom_call.1} parent=72 // pred_check
            _
          $region75: #{tpu_custom_call.1} parent=72 // pred_check_branch
            %343 = sbr.rel (0) target = $region77
          $region76: #{tpu_custom_call.1} parent=72 // pred_region
            // Predicated region
            $region78: #{tpu_custom_call.1} parent=76 // pred_check
              _
            $region79: #{tpu_custom_call.1} parent=76 // pred_check_branch
              %345 = sbr.rel target = $region81
            $region80: #{tpu_custom_call.1} parent=76 // pred_region
              // Predicated region
              $region93: #{tpu_custom_call.1} parent=80 // pred_check
                _
              $region94: #{tpu_custom_call.1} parent=80 // pred_check_branch
                %422 = sbr.rel (0) target = $region96
              $region95: #{tpu_custom_call.1} parent=80 // pred_region
                loop: start=0, step=1, limit=1
                $region97: #{tpu_custom_call.1} parent=95 // loop_pre_header
                  _
                $region98: #{tpu_custom_call.1} parent=95 // loop_header
                  %s424 = sphi 0, %s428
                  %p425 = scmp.ge.s32.totalorder %s424, 1
                  %s429 = sphi %s341, %s341
                  %s430 = sphi %s338, %s338
                $region99: #{tpu_custom_call.1} parent=95 // loop_header_branch
                  %427 = sbr.rel (%p425) target = $region103
                $region100: #{tpu_custom_call.1} parent=95 // loop_body
                  _
                $region101: #{tpu_custom_call.1} parent=95 // loop_footer
                  %s428 = sadd.s32 1, %s424
                $region102: #{tpu_custom_call.1} parent=95 // loop_footer_branch
                  %423 = sbr.rel target = $region98
                $region103: #{tpu_custom_call.1} parent=95 // loop_exit
                  _
                loop: start=0, step=1, limit=1
                $region104: #{tpu_custom_call.1} parent=95 // loop_pre_header
                  _
                $region105: #{tpu_custom_call.1} parent=95 // loop_header
                  %s433 = sphi 0, %s437
                  %p434 = scmp.ge.s32.totalorder %s433, 1
                  %s438 = sphi %s341, %s341
                  %s439 = sphi %s338, %s338
                $region106: #{tpu_custom_call.1} parent=95 // loop_header_branch
                  %436 = sbr.rel (%p434) target = $region110
                $region107: #{tpu_custom_call.1} parent=95 // loop_body
                  %v440 = vld [vmem:[%s438] sm:$0xf]
                  %441 = vst [vmem:[%s439] sm:$0xf] %v440
                  %v442 = vld [vmem:[%s438 + $0x4] sm:$0xf]
                  %443 = vst [vmem:[%s439 + $0x4] sm:$0xf] %v442
                  %v444 = vld [vmem:[%s438 + $0x8] sm:$0xf]
                  %445 = vst [vmem:[%s439 + $0x8] sm:$0xf] %v444
                  %v446 = vld [vmem:[%s438 + $0xc] sm:$0xf]
                  %447 = vst [vmem:[%s439 + $0xc] sm:$0xf] %v446
                  %v448 = vld [vmem:[%s438 + $0x10] sm:$0xf]
                  %449 = vst [vmem:[%s439 + $0x10] sm:$0xf] %v448
                  %v450 = vld [vmem:[%s438 + $0x14] sm:$0xf]
                  %451 = vst [vmem:[%s439 + $0x14] sm:$0xf] %v450
                  %v452 = vld [vmem:[%s438 + $0x18] sm:$0xf]
                  %453 = vst [vmem:[%s439 + $0x18] sm:$0xf] %v452
                  %v454 = vld [vmem:[%s438 + $0x1c] sm:$0xf]
                  %455 = vst [vmem:[%s439 + $0x1c] sm:$0xf] %v454
                  %v456 = vld [vmem:[%s438 + $0x20] sm:$0xf]
                  %457 = vst [vmem:[%s439 + $0x20] sm:$0xf] %v456
                  %v458 = vld [vmem:[%s438 + $0x24] sm:$0xf]
                  %459 = vst [vmem:[%s439 + $0x24] sm:$0xf] %v458
                  %v460 = vld [vmem:[%s438 + $0x28] sm:$0xf]
                  %461 = vst [vmem:[%s439 + $0x28] sm:$0xf] %v460
                  %v462 = vld [vmem:[%s438 + $0x2c] sm:$0xf]
                  %463 = vst [vmem:[%s439 + $0x2c] sm:$0xf] %v462
                  %v464 = vld [vmem:[%s438 + $0x30] sm:$0xf]
                  %465 = vst [vmem:[%s439 + $0x30] sm:$0xf] %v464
                  %v466 = vld [vmem:[%s438 + $0x34] sm:$0xf]
                  %467 = vst [vmem:[%s439 + $0x34] sm:$0xf] %v466
                  %v468 = vld [vmem:[%s438 + $0x38] sm:$0xf]
                  %469 = vst [vmem:[%s439 + $0x38] sm:$0xf] %v468
                  %v470 = vld [vmem:[%s438 + $0x3c] sm:$0xf]
                  %471 = vst [vmem:[%s439 + $0x3c] sm:$0xf] %v470
                  %v472 = vld [vmem:[%s438 + $0x80] sm:$0xf]
                  %473 = vst [vmem:[%s439 + $0x40] sm:$0xf] %v472
                  %v474 = vld [vmem:[%s438 + $0x84] sm:$0xf]
                  %475 = vst [vmem:[%s439 + $0x44] sm:$0xf] %v474
                  %v476 = vld [vmem:[%s438 + $0x88] sm:$0xf]
                  %477 = vst [vmem:[%s439 + $0x48] sm:$0xf] %v476
                  %v478 = vld [vmem:[%s438 + $0x8c] sm:$0xf]
                  %479 = vst [vmem:[%s439 + $0x4c] sm:$0xf] %v478
                  %v480 = vld [vmem:[%s438 + $0x90] sm:$0xf]
                  %481 = vst [vmem:[%s439 + $0x50] sm:$0xf] %v480
                  %v482 = vld [vmem:[%s438 + $0x94] sm:$0xf]
                  %483 = vst [vmem:[%s439 + $0x54] sm:$0xf] %v482
                  %v484 = vld [vmem:[%s438 + $0x98] sm:$0xf]
                  %485 = vst [vmem:[%s439 + $0x58] sm:$0xf] %v484
                  %v486 = vld [vmem:[%s438 + $0x9c] sm:$0xf]
                  %487 = vst [vmem:[%s439 + $0x5c] sm:$0xf] %v486
                  %v488 = vld [vmem:[%s438 + $0xa0] sm:$0xf]
                  %489 = vst [vmem:[%s439 + $0x60] sm:$0xf] %v488
                  %v490 = vld [vmem:[%s438 + $0xa4] sm:$0xf]
                  %491 = vst [vmem:[%s439 + $0x64] sm:$0xf] %v490
                  %v492 = vld [vmem:[%s438 + $0xa8] sm:$0xf]
                  %493 = vst [vmem:[%s439 + $0x68] sm:$0xf] %v492
                  %v494 = vld [vmem:[%s438 + $0xac] sm:$0xf]
                  %495 = vst [vmem:[%s439 + $0x6c] sm:$0xf] %v494
                  %v496 = vld [vmem:[%s438 + $0xb0] sm:$0xf]
                  %497 = vst [vmem:[%s439 + $0x70] sm:$0xf] %v496
                  %v498 = vld [vmem:[%s438 + $0xb4] sm:$0xf]
                  %499 = vst [vmem:[%s439 + $0x74] sm:$0xf] %v498
                  %v500 = vld [vmem:[%s438 + $0xb8] sm:$0xf]
                  %501 = vst [vmem:[%s439 + $0x78] sm:$0xf] %v500
                  %v502 = vld [vmem:[%s438 + $0xbc] sm:$0xf]
                  %503 = vst [vmem:[%s439 + $0x7c] sm:$0xf] %v502
                $region108: #{tpu_custom_call.1} parent=95 // loop_footer
                  %s437 = sadd.s32 1, %s433
                $region109: #{tpu_custom_call.1} parent=95 // loop_footer_branch
                  %432 = sbr.rel target = $region105
                $region110: #{tpu_custom_call.1} parent=95 // loop_exit
                  _
              $region96: #{tpu_custom_call.1} parent=80 // pred_fallthru
                _
            $region81: #{tpu_custom_call.1} parent=76 // pred_fallthru
              _
            // Predicated region
            $region82: #{tpu_custom_call.1} parent=76 // pred_check
              _
            $region83: #{tpu_custom_call.1} parent=76 // pred_check_branch
              %347 = sbr.rel (0) target = $region85
            $region84: #{tpu_custom_call.1} parent=76 // pred_region
              loop: start=0, step=1, limit=1
              $region86: #{tpu_custom_call.1} parent=84 // loop_pre_header
                _
              $region87: #{tpu_custom_call.1} parent=84 // loop_header
                %s350 = sphi 0, %s354
                %p351 = scmp.ge.s32.totalorder %s350, 1
                %s355 = sphi %s341, %s341
                %s356 = sphi %s338, %s338
              $region88: #{tpu_custom_call.1} parent=84 // loop_header_branch
                %353 = sbr.rel (%p351) target = $region92
              $region89: #{tpu_custom_call.1} parent=84 // loop_body
                %v357 = vld [vmem:[%s355] sm:$0xf]
                %358 = vst [vmem:[%s356] sm:$0xf] %v357
                %v359 = vld [vmem:[%s355 + $0x4] sm:$0xf]
                %360 = vst [vmem:[%s356 + $0x4] sm:$0xf] %v359
                %v361 = vld [vmem:[%s355 + $0x8] sm:$0xf]
                %362 = vst [vmem:[%s356 + $0x8] sm:$0xf] %v361
                %v363 = vld [vmem:[%s355 + $0xc] sm:$0xf]
                %364 = vst [vmem:[%s356 + $0xc] sm:$0xf] %v363
                %v365 = vld [vmem:[%s355 + $0x10] sm:$0xf]
                %366 = vst [vmem:[%s356 + $0x10] sm:$0xf] %v365
                %v367 = vld [vmem:[%s355 + $0x14] sm:$0xf]
                %368 = vst [vmem:[%s356 + $0x14] sm:$0xf] %v367
                %v369 = vld [vmem:[%s355 + $0x18] sm:$0xf]
                %370 = vst [vmem:[%s356 + $0x18] sm:$0xf] %v369
                %v371 = vld [vmem:[%s355 + $0x1c] sm:$0xf]
                %372 = vst [vmem:[%s356 + $0x1c] sm:$0xf] %v371
                %v373 = vld [vmem:[%s355 + $0x20] sm:$0xf]
                %374 = vst [vmem:[%s356 + $0x20] sm:$0xf] %v373
                %v375 = vld [vmem:[%s355 + $0x24] sm:$0xf]
                %376 = vst [vmem:[%s356 + $0x24] sm:$0xf] %v375
                %v377 = vld [vmem:[%s355 + $0x28] sm:$0xf]
                %378 = vst [vmem:[%s356 + $0x28] sm:$0xf] %v377
                %v379 = vld [vmem:[%s355 + $0x2c] sm:$0xf]
                %380 = vst [vmem:[%s356 + $0x2c] sm:$0xf] %v379
                %v381 = vld [vmem:[%s355 + $0x30] sm:$0xf]
                %382 = vst [vmem:[%s356 + $0x30] sm:$0xf] %v381
                %v383 = vld [vmem:[%s355 + $0x34] sm:$0xf]
                %384 = vst [vmem:[%s356 + $0x34] sm:$0xf] %v383
                %v385 = vld [vmem:[%s355 + $0x38] sm:$0xf]
                %386 = vst [vmem:[%s356 + $0x38] sm:$0xf] %v385
                %v387 = vld [vmem:[%s355 + $0x3c] sm:$0xf]
                %388 = vst [vmem:[%s356 + $0x3c] sm:$0xf] %v387
                %v389 = vld [vmem:[%s355 + $0x80] sm:$0xf]
                %390 = vst [vmem:[%s356 + $0x40] sm:$0xf] %v389
                %v391 = vld [vmem:[%s355 + $0x84] sm:$0xf]
                %392 = vst [vmem:[%s356 + $0x44] sm:$0xf] %v391
                %v393 = vld [vmem:[%s355 + $0x88] sm:$0xf]
                %394 = vst [vmem:[%s356 + $0x48] sm:$0xf] %v393
                %v395 = vld [vmem:[%s355 + $0x8c] sm:$0xf]
                %396 = vst [vmem:[%s356 + $0x4c] sm:$0xf] %v395
                %v397 = vld [vmem:[%s355 + $0x90] sm:$0xf]
                %398 = vst [vmem:[%s356 + $0x50] sm:$0xf] %v397
                %v399 = vld [vmem:[%s355 + $0x94] sm:$0xf]
                %400 = vst [vmem:[%s356 + $0x54] sm:$0xf] %v399
                %v401 = vld [vmem:[%s355 + $0x98] sm:$0xf]
                %402 = vst [vmem:[%s356 + $0x58] sm:$0xf] %v401
                %v403 = vld [vmem:[%s355 + $0x9c] sm:$0xf]
                %404 = vst [vmem:[%s356 + $0x5c] sm:$0xf] %v403
                %v405 = vld [vmem:[%s355 + $0xa0] sm:$0xf]
                %406 = vst [vmem:[%s356 + $0x60] sm:$0xf] %v405
                %v407 = vld [vmem:[%s355 + $0xa4] sm:$0xf]
                %408 = vst [vmem:[%s356 + $0x64] sm:$0xf] %v407
                %v409 = vld [vmem:[%s355 + $0xa8] sm:$0xf]
                %410 = vst [vmem:[%s356 + $0x68] sm:$0xf] %v409
                %v411 = vld [vmem:[%s355 + $0xac] sm:$0xf]
                %412 = vst [vmem:[%s356 + $0x6c] sm:$0xf] %v411
                %v413 = vld [vmem:[%s355 + $0xb0] sm:$0xf]
                %414 = vst [vmem:[%s356 + $0x70] sm:$0xf] %v413
                %v415 = vld [vmem:[%s355 + $0xb4] sm:$0xf]
                %416 = vst [vmem:[%s356 + $0x74] sm:$0xf] %v415
                %v417 = vld [vmem:[%s355 + $0xb8] sm:$0xf]
                %418 = vst [vmem:[%s356 + $0x78] sm:$0xf] %v417
                %v419 = vld [vmem:[%s355 + $0xbc] sm:$0xf]
                %420 = vst [vmem:[%s356 + $0x7c] sm:$0xf] %v419
              $region90: #{tpu_custom_call.1} parent=84 // loop_footer
                %s354 = sadd.s32 1, %s350
              $region91: #{tpu_custom_call.1} parent=84 // loop_footer_branch
                %349 = sbr.rel target = $region87
              $region92: #{tpu_custom_call.1} parent=84 // loop_exit
                _
            $region85: #{tpu_custom_call.1} parent=76 // pred_fallthru
              _
          $region77: #{tpu_custom_call.1} parent=72 // pred_fallthru
            _
          %504 = vnop
        $region73: #{tpu_custom_call.1} parent=27 // pred_fallthru
          _
        // Predicated region
        $region111: #{tpu_custom_call.1} parent=27 // pred_check
          %p505 = pneg %p98
        $region112: #{tpu_custom_call.1} parent=27 // pred_check_branch
          %507 = sbr.rel (%p505) target = $region114
        $region113: #{tpu_custom_call.1} parent=27 // pred_region
          %s508 = smul.u32 16, %s19
          %p509 = scmp.lt.s32.totalorder %s508, 31
          %s510 = scalar_select %p509, %s508, 31
          %s511 = smul.addr %s510, 4
          %s512 = scalar_lea.vmem %s2, %s511
          %s513 = smul.u32 16, %s19
        $region114: #{tpu_custom_call.1} parent=27 // pred_fallthru
          _
      $region28: #{tpu_custom_call.1} parent=5 // pred_fallthru
        _
      %p514 = scmp.le.s32.totalorder 1, %s12
      %p515 = scmp.lt.s32.totalorder %s12, 5
      %p516 = pnand %p514, %p515
      %p517 = pneg %p516
      // Predicated region
      $region115: #{tpu_custom_call.1} parent=5 // pred_check
        _
      $region116: #{tpu_custom_call.1} parent=5 // pred_check_branch
        %519 = sbr.rel (%p516) target = $region118
      $region117: #{tpu_custom_call.1} parent=5 // pred_region
        %s520 = ssub.s32 %s12, 1
        %s521 = sand.u32 %s39, 1
        %s522 = sand.u32 %s39, 1
        %s523 = smul.addr %s522, 64
        %s524 = scalar_lea.vmem [#allocation3], %s523
        // Predicated region
        $region119: #{tpu_custom_call.1} parent=117 // pred_check
          %p525 = pneg %p52
        $region120: #{tpu_custom_call.1} parent=117 // pred_check_branch
          %527 = sbr.rel (%p525) target = $region122
        $region121: #{tpu_custom_call.1} parent=117 // pred_region
          _
        $region122: #{tpu_custom_call.1} parent=117 // pred_fallthru
          _
        %s528 = sand.u32 %s65, 1
        %s529 = sand.u32 %s65, 1
        %s530 = smul.addr %s529, 128
        %s531 = scalar_lea.vmem [#allocation4], %s530
        // Predicated region
        $region123: #{tpu_custom_call.1} parent=117 // pred_check
          %p532 = pneg %p78
        $region124: #{tpu_custom_call.1} parent=117 // pred_check_branch
          %534 = sbr.rel (%p532) target = $region126
        $region125: #{tpu_custom_call.1} parent=117 // pred_region
          _
        $region126: #{tpu_custom_call.1} parent=117 // pred_fallthru
          _
        %s535 = sand.u32 %s39, 1
        %s536 = sand.u32 %s39, 1
        %s537 = smul.addr %s536, 64
        %s538 = scalar_lea.vmem [#allocation3], %s537
        %p539 = pneg %p52
        %p540 = pneg %p49
        %s541 = sand.u32 %s65, 1
        %s542 = sand.u32 %s65, 1
        %s543 = smul.addr %s542, 128
        %s544 = scalar_lea.vmem [#allocation4], %s543
        %p545 = pneg %p78
        %p546 = pneg %p75
        %s547 = smul.u32 16, %s21
        %p548 = scmp.lt.s32.totalorder %s547, 31
        %s549 = scalar_select %p548, %s547, 31
        %s550 = smul.addr %s549, 4
        %s551 = scalar_lea.vmem %s2, %s550
        %p552 = pneg %p104
        %p553 = pneg %p101
        %p554 = pneg %p125
        %p555 = pneg %p122
        %p556 = pneg %p146
        %p557 = pneg %p143
        %p558 = pneg %p167
        %p559 = pneg %p164
        %p560 = pneg %p193
        %p561 = pneg %p190
        %s562 = smul.u32 16, %s21
        %p563 = scmp.lt.s32.totalorder %s562, 31
        %s564 = scalar_select %p563, %s562, 31
        %s565 = smul.addr %s564, 8
        %s566 = scalar_lea.vmem %s6, %s565
        %s567 = smul.u32 16, %s21
        %s568 = smul.u32 16, %s22
        %s569 = smul.u32 16, %s21
        %p570 = scmp.lt.s32.totalorder %s569, 31
        %s571 = scalar_select %p570, %s569, 31
        %s572 = smul.addr %s571, 4
        %s573 = scalar_lea.vmem %s2, %s572
        %s574 = smul.u32 16, %s21
        %s575 = smul.u32 16, %s21
        %p576 = scmp.lt.s32.totalorder %s575, 31
        %s577 = scalar_select %p576, %s575, 31
        %s578 = smul.addr %s577, 8
        %s579 = scalar_lea.vmem %s6, %s578
        %s580 = smul.u32 16, %s21
        %p582 = scmp.eq.s32.totalorder %s22, 0
        // Predicated region
        $region127: #{tpu_custom_call.1} parent=117 // pred_check
          %p583 = pneg %p582
        $region128: #{tpu_custom_call.1} parent=117 // pred_check_branch
          %585 = sbr.rel (%p583) target = $region130
        $region129: #{tpu_custom_call.1} parent=117 // pred_region
          %vm586 = vcmask 130048
          %587 = vst.msk [vmem:[#allocation2] sm:$0xff] %vm586, 0.0
          %588 = vst.msk [vmem:[#allocation2 + $0x8] sm:$0xff] %vm586, 0.0
          %589 = vst.msk [vmem:[#allocation2 + $0x10] sm:$0xff] %vm586, 0.0
          %590 = vst.msk [vmem:[#allocation2 + $0x18] sm:$0xff] %vm586, 0.0
          %591 = vst.msk [vmem:[#allocation2 + $0x20] sm:$0xff] %vm586, 0.0
          %592 = vst.msk [vmem:[#allocation2 + $0x28] sm:$0xff] %vm586, 0.0
          %593 = vst.msk [vmem:[#allocation2 + $0x30] sm:$0xff] %vm586, 0.0
          %594 = vst.msk [vmem:[#allocation2 + $0x38] sm:$0xff] %vm586, 0.0
          %595 = vst.msk [vmem:[#allocation2 + $0x40] sm:$0xff] %vm586, 0.0
          %596 = vst.msk [vmem:[#allocation2 + $0x48] sm:$0xff] %vm586, 0.0
          %597 = vst.msk [vmem:[#allocation2 + $0x50] sm:$0xff] %vm586, 0.0
          %598 = vst.msk [vmem:[#allocation2 + $0x58] sm:$0xff] %vm586, 0.0
          %599 = vst.msk [vmem:[#allocation2 + $0x60] sm:$0xff] %vm586, 0.0
          %600 = vst.msk [vmem:[#allocation2 + $0x68] sm:$0xff] %vm586, 0.0
          %601 = vst.msk [vmem:[#allocation2 + $0x70] sm:$0xff] %vm586, 0.0
          %602 = vst.msk [vmem:[#allocation2 + $0x78] sm:$0xff] %vm586, 0.0
        $region130: #{tpu_custom_call.1} parent=117 // pred_fallthru
          _
        %v603 = vld [vmem:[%s531] sm:$0xf]
        %v604 = vld [vmem:[%s531 + $0x4] sm:$0xf]
        %v605 = vld [vmem:[%s531 + $0x8] sm:$0xf]
        %v606 = vld [vmem:[%s531 + $0xc] sm:$0xf]
        %v607 = vld [vmem:[%s531 + $0x10] sm:$0xf]
        %v608 = vld [vmem:[%s531 + $0x14] sm:$0xf]
        %v609 = vld [vmem:[%s531 + $0x18] sm:$0xf]
        %v610 = vld [vmem:[%s531 + $0x1c] sm:$0xf]
        %v611 = vld [vmem:[%s531 + $0x20] sm:$0xf]
        %v612 = vld [vmem:[%s531 + $0x24] sm:$0xf]
        %v613 = vld [vmem:[%s531 + $0x28] sm:$0xf]
        %v614 = vld [vmem:[%s531 + $0x2c] sm:$0xf]
        %v615 = vld [vmem:[%s531 + $0x30] sm:$0xf]
        %v616 = vld [vmem:[%s531 + $0x34] sm:$0xf]
        %v617 = vld [vmem:[%s531 + $0x38] sm:$0xf]
        %v618 = vld [vmem:[%s531 + $0x3c] sm:$0xf]
        %v619 = vld [vmem:[%s531 + $0x40] sm:$0xf]
        %v620 = vld [vmem:[%s531 + $0x44] sm:$0xf]
        %v621 = vld [vmem:[%s531 + $0x48] sm:$0xf]
        %v622 = vld [vmem:[%s531 + $0x4c] sm:$0xf]
        %v623 = vld [vmem:[%s531 + $0x50] sm:$0xf]
        %v624 = vld [vmem:[%s531 + $0x54] sm:$0xf]
        %v625 = vld [vmem:[%s531 + $0x58] sm:$0xf]
        %v626 = vld [vmem:[%s531 + $0x5c] sm:$0xf]
        %v627 = vld [vmem:[%s531 + $0x60] sm:$0xf]
        %v628 = vld [vmem:[%s531 + $0x64] sm:$0xf]
        %v629 = vld [vmem:[%s531 + $0x68] sm:$0xf]
        %v630 = vld [vmem:[%s531 + $0x6c] sm:$0xf]
        %v631 = vld [vmem:[%s531 + $0x70] sm:$0xf]
        %v632 = vld [vmem:[%s531 + $0x74] sm:$0xf]
        %v633 = vld [vmem:[%s531 + $0x78] sm:$0xf]
        %v634 = vld [vmem:[%s531 + $0x7c] sm:$0xf]
        %v635 = vld [vmem:[%s3] sm:$0x3]
        %v636 = vld [vmem:[%s3 + $0x2] sm:$0x3]
        %v653 = vunpack.c.l.b16 %v603
        %v654 = vunpack.c.l.b16 %v604
        %v655 = vunpack.c.l.b16 %v605
        %v656 = vunpack.c.l.b16 %v606
        %v657 = vunpack.c.l.b16 %v607
        %v658 = vunpack.c.l.b16 %v608
        %v659 = vunpack.c.l.b16 %v609
        %v660 = vunpack.c.l.b16 %v610
        %v661 = vunpack.c.l.b16 %v611
        %v662 = vunpack.c.l.b16 %v612
        %v663 = vunpack.c.l.b16 %v613
        %v664 = vunpack.c.l.b16 %v614
        %v665 = vunpack.c.l.b16 %v615
        %v666 = vunpack.c.l.b16 %v616
        %v667 = vunpack.c.l.b16 %v617
        %v668 = vunpack.c.l.b16 %v618
        %v669 = vpack.c.b16 %v654, %v653
        %v670 = vpack.c.b16 %v656, %v655
        %v671 = vpack.c.b16 %v658, %v657
        %v672 = vpack.c.b16 %v660, %v659
        %v673 = vpack.c.b16 %v662, %v661
        %v674 = vpack.c.b16 %v664, %v663
        %v675 = vpack.c.b16 %v666, %v665
        %v676 = vpack.c.b16 %v668, %v667
        %vm677 = vcmask 31744
        %v679 = vsel %vm677, %v669, 0
        %v682 = vsel %vm677, %v670, 0
        %v685 = vsel %vm677, %v671, 0
        %v688 = vsel %vm677, %v672, 0
        %v691 = vsel %vm677, %v673, 0
        %v694 = vsel %vm677, %v674, 0
        %v697 = vsel %vm677, %v675, 0
        %v700 = vsel %vm677, %v676, 0
        %vm702 = vcmask 1041408
        %v704 = vsel %vm702, %v635, 0
        %706 = vmatprep.subr.bf16.mxu0 0
        %707 = vmatpush1.bf16.msra.mxu0 %v704
        %708 = vmatprep.subr.bf16.mxu0 0
        %709 = vmatpush1.bf16.msra.mxu0 0
        %710 = vmatprep.subr.bf16.mxu0 0
        %711 = vmatpush1.bf16.msra.mxu0 0
        %712 = vmatprep.subr.bf16.mxu0 0
        %713 = vmatpush1.bf16.msra.mxu0 0
        %714 = vmatprep.subr.bf16.mxu0 0
        %715 = vmatpush1.bf16.msra.mxu0 0
        %716 = vmatprep.subr.bf16.mxu0 0
        %717 = vmatpush1.bf16.msra.mxu0 0
        %718 = vmatprep.subr.bf16.mxu0 0
        %719 = vmatpush1.bf16.msra.mxu0 0
        %720 = vmatprep.subr.bf16.mxu0 0
        %721 = vmatpush1.bf16.msra.mxu0 0
        %722 = vmatprep.subr.bf16.mxu0 0
        %723 = vmatpush1.bf16.msra.mxu0 0
        %724 = vmatprep.subr.bf16.mxu0 0
        %725 = vmatpush1.bf16.msra.mxu0 0
        %726 = vmatprep.subr.bf16.mxu0 0
        %727 = vmatpush1.bf16.msra.mxu0 0
        %728 = vmatprep.subr.bf16.mxu0 0
        %729 = vmatpush1.bf16.msra.mxu0 0
        %730 = vmatprep.subr.bf16.mxu0 0
        %731 = vmatpush1.bf16.msra.mxu0 0
        %732 = vmatprep.subr.bf16.mxu0 0
        %733 = vmatpush1.bf16.msra.mxu0 0
        %734 = vmatprep.subr.bf16.mxu0 0
        %735 = vmatpush1.bf16.msra.mxu0 0
        %736 = vmatprep.subr.bf16.mxu0 0
        %737 = vmatpush1.bf16.msra.mxu0 0
        %738 = vmatprep.mubr.bf16.mxu0 0
        %739 = vmatmul.mubr.bf16.gmra.mrb[0].mxu0 %v679
        %v740 = vpop.f32.mrb[0].mxu0
        %v741 = vadd.f32 0.0, %v740
        %v742 = vpop.f32.mrb[0].mxu0
        %v743 = vpop.f32.mrb[0].mxu0
        %v744 = vadd.f32 0.0, %v743
        %v745 = vpop.f32.mrb[0].mxu0
        %746 = vmatprep.mubr.bf16.mxu0 0
        %747 = vmatmul.mubr.bf16.gmra.mrb[0].mxu0 %v682
        %v748 = vpop.f32.mrb[0].mxu0
        %v749 = vadd.f32 0.0, %v748
        %v750 = vpop.f32.mrb[0].mxu0
        %v751 = vpop.f32.mrb[0].mxu0
        %v752 = vadd.f32 0.0, %v751
        %v753 = vpop.f32.mrb[0].mxu0
        %754 = vmatprep.mubr.bf16.mxu0 0
        %755 = vmatmul.mubr.bf16.gmra.mrb[0].mxu0 %v685
        %v756 = vpop.f32.mrb[0].mxu0
        %v757 = vadd.f32 0.0, %v756
        %v758 = vpop.f32.mrb[0].mxu0
        %v759 = vpop.f32.mrb[0].mxu0
        %v760 = vadd.f32 0.0, %v759
        %v761 = vpop.f32.mrb[0].mxu0
        %762 = vmatprep.mubr.bf16.mxu0 0
        %763 = vmatmul.mubr.bf16.gmra.mrb[0].mxu0 %v688
        %v764 = vpop.f32.mrb[0].mxu0
        %v765 = vadd.f32 0.0, %v764
        %v766 = vpop.f32.mrb[0].mxu0
        %v767 = vpop.f32.mrb[0].mxu0
        %v768 = vadd.f32 0.0, %v767
        %v769 = vpop.f32.mrb[0].mxu0
        %770 = vmatprep.mubr.bf16.mxu0 0
        %771 = vmatmul.mubr.bf16.gmra.mrb[0].mxu0 %v691
        %v772 = vpop.f32.mrb[0].mxu0
        %v773 = vadd.f32 0.0, %v772
        %v774 = vpop.f32.mrb[0].mxu0
        %v775 = vpop.f32.mrb[0].mxu0
        %v776 = vadd.f32 0.0, %v775
        %v777 = vpop.f32.mrb[0].mxu0
        %778 = vmatprep.mubr.bf16.mxu0 0
        %779 = vmatmul.mubr.bf16.gmra.mrb[0].mxu0 %v694
        %v780 = vpop.f32.mrb[0].mxu0
        %v781 = vadd.f32 0.0, %v780
        %v782 = vpop.f32.mrb[0].mxu0
        %v783 = vpop.f32.mrb[0].mxu0
        %v784 = vadd.f32 0.0, %v783
        %v785 = vpop.f32.mrb[0].mxu0
        %786 = vmatprep.mubr.bf16.mxu0 0
        %787 = vmatmul.mubr.bf16.gmra.mrb[0].mxu0 %v697
        %v788 = vpop.f32.mrb[0].mxu0
        %v789 = vadd.f32 0.0, %v788
        %v790 = vpop.f32.mrb[0].mxu0
        %v791 = vpop.f32.mrb[0].mxu0
        %v792 = vadd.f32 0.0, %v791
        %v793 = vpop.f32.mrb[0].mxu0
        %794 = vmatprep.mubr.bf16.mxu0 0
        %795 = vmatmul.mubr.bf16.gmra.mrb[0].mxu0 %v700
        %v796 = vpop.f32.mrb[0].mxu0
        %v797 = vadd.f32 0.0, %v796
        %v798 = vpop.f32.mrb[0].mxu0
        %v799 = vpop.f32.mrb[0].mxu0
        %v800 = vadd.f32 0.0, %v799
        %v801 = vpop.f32.mrb[0].mxu0
        %802 = vdwg.mxu0
        %v819 = vunpack.c.l.b16 %v619
        %v820 = vunpack.c.l.b16 %v620
        %v821 = vunpack.c.l.b16 %v621
        %v822 = vunpack.c.l.b16 %v622
        %v823 = vunpack.c.l.b16 %v623
        %v824 = vunpack.c.l.b16 %v624
        %v825 = vunpack.c.l.b16 %v625
        %v826 = vunpack.c.l.b16 %v626
        %v827 = vunpack.c.l.b16 %v627
        %v828 = vunpack.c.l.b16 %v628
        %v829 = vunpack.c.l.b16 %v629
        %v830 = vunpack.c.l.b16 %v630
        %v831 = vunpack.c.l.b16 %v631
        %v832 = vunpack.c.l.b16 %v632
        %v833 = vunpack.c.l.b16 %v633
        %v834 = vunpack.c.l.b16 %v634
        %v835 = vpack.c.b16 %v820, %v819
        %v836 = vpack.c.b16 %v822, %v821
        %v837 = vpack.c.b16 %v824, %v823
        %v838 = vpack.c.b16 %v826, %v825
        %v839 = vpack.c.b16 %v828, %v827
        %v840 = vpack.c.b16 %v830, %v829
        %v841 = vpack.c.b16 %v832, %v831
        %v842 = vpack.c.b16 %v834, %v833
        %v844 = vsel %vm677, %v835, 0
        %v847 = vsel %vm677, %v836, 0
        %v850 = vsel %vm677, %v837, 0
        %v853 = vsel %vm677, %v838, 0
        %v856 = vsel %vm677, %v839, 0
        %v859 = vsel %vm677, %v840, 0
        %v862 = vsel %vm677, %v841, 0
        %v865 = vsel %vm677, %v842, 0
        %v868 = vsel %vm702, %v636, 0
        %870 = vmatprep.subr.bf16.mxu0 0
        %871 = vmatpush1.bf16.msra.mxu0 %v868
        %872 = vmatprep.subr.bf16.mxu0 0
        %873 = vmatpush1.bf16.msra.mxu0 0
        %874 = vmatprep.subr.bf16.mxu0 0
        %875 = vmatpush1.bf16.msra.mxu0 0
        %876 = vmatprep.subr.bf16.mxu0 0
        %877 = vmatpush1.bf16.msra.mxu0 0
        %878 = vmatprep.subr.bf16.mxu0 0
        %879 = vmatpush1.bf16.msra.mxu0 0
        %880 = vmatprep.subr.bf16.mxu0 0
        %881 = vmatpush1.bf16.msra.mxu0 0
        %882 = vmatprep.subr.bf16.mxu0 0
        %883 = vmatpush1.bf16.msra.mxu0 0
        %884 = vmatprep.subr.bf16.mxu0 0
        %885 = vmatpush1.bf16.msra.mxu0 0
        %886 = vmatprep.subr.bf16.mxu0 0
        %887 = vmatpush1.bf16.msra.mxu0 0
        %888 = vmatprep.subr.bf16.mxu0 0
        %889 = vmatpush1.bf16.msra.mxu0 0
        %890 = vmatprep.subr.bf16.mxu0 0
        %891 = vmatpush1.bf16.msra.mxu0 0
        %892 = vmatprep.subr.bf16.mxu0 0
        %893 = vmatpush1.bf16.msra.mxu0 0
        %894 = vmatprep.subr.bf16.mxu0 0
        %895 = vmatpush1.bf16.msra.mxu0 0
        %896 = vmatprep.subr.bf16.mxu0 0
        %897 = vmatpush1.bf16.msra.mxu0 0
        %898 = vmatprep.subr.bf16.mxu0 0
        %899 = vmatpush1.bf16.msra.mxu0 0
        %900 = vmatprep.subr.bf16.mxu0 0
        %901 = vmatpush1.bf16.msra.mxu0 0
        %902 = vmatprep.mubr.bf16.mxu0 0
        %903 = vmatmul.mubr.bf16.gmra.mrb[0].mxu0 %v844
        %v904 = vpop.f32.mrb[0].mxu0
        %v905 = vadd.f32 0.0, %v904
        %v906 = vpop.f32.mrb[0].mxu0
        %v907 = vpop.f32.mrb[0].mxu0
        %v908 = vadd.f32 0.0, %v907
        %v909 = vpop.f32.mrb[0].mxu0
        %910 = vmatprep.mubr.bf16.mxu0 0
        %911 = vmatmul.mubr.bf16.gmra.mrb[0].mxu0 %v847
        %v912 = vpop.f32.mrb[0].mxu0
        %v913 = vadd.f32 0.0, %v912
        %v914 = vpop.f32.mrb[0].mxu0
        %v915 = vpop.f32.mrb[0].mxu0
        %v916 = vadd.f32 0.0, %v915
        %v917 = vpop.f32.mrb[0].mxu0
        %918 = vmatprep.mubr.bf16.mxu0 0
        %919 = vmatmul.mubr.bf16.gmra.mrb[0].mxu0 %v850
        %v920 = vpop.f32.mrb[0].mxu0
        %v921 = vadd.f32 0.0, %v920
        %v922 = vpop.f32.mrb[0].mxu0
        %v923 = vpop.f32.mrb[0].mxu0
        %v924 = vadd.f32 0.0, %v923
        %v925 = vpop.f32.mrb[0].mxu0
        %926 = vmatprep.mubr.bf16.mxu0 0
        %927 = vmatmul.mubr.bf16.gmra.mrb[0].mxu0 %v853
        %v928 = vpop.f32.mrb[0].mxu0
        %v929 = vadd.f32 0.0, %v928
        %v930 = vpop.f32.mrb[0].mxu0
        %v931 = vpop.f32.mrb[0].mxu0
        %v932 = vadd.f32 0.0, %v931
        %v933 = vpop.f32.mrb[0].mxu0
        %934 = vmatprep.mubr.bf16.mxu0 0
        %935 = vmatmul.mubr.bf16.gmra.mrb[0].mxu0 %v856
        %v936 = vpop.f32.mrb[0].mxu0
        %v937 = vadd.f32 0.0, %v936
        %v938 = vpop.f32.mrb[0].mxu0
        %v939 = vpop.f32.mrb[0].mxu0
        %v940 = vadd.f32 0.0, %v939
        %v941 = vpop.f32.mrb[0].mxu0
        %942 = vmatprep.mubr.bf16.mxu0 0
        %943 = vmatmul.mubr.bf16.gmra.mrb[0].mxu0 %v859
        %v944 = vpop.f32.mrb[0].mxu0
        %v945 = vadd.f32 0.0, %v944
        %v946 = vpop.f32.mrb[0].mxu0
        %v947 = vpop.f32.mrb[0].mxu0
        %v948 = vadd.f32 0.0, %v947
        %v949 = vpop.f32.mrb[0].mxu0
        %950 = vmatprep.mubr.bf16.mxu0 0
        %951 = vmatmul.mubr.bf16.gmra.mrb[0].mxu0 %v862
        %v952 = vpop.f32.mrb[0].mxu0
        %v953 = vadd.f32 0.0, %v952
        %v954 = vpop.f32.mrb[0].mxu0
        %v955 = vpop.f32.mrb[0].mxu0
        %v956 = vadd.f32 0.0, %v955
        %v957 = vpop.f32.mrb[0].mxu0
        %958 = vmatprep.mubr.bf16.mxu0 0
        %959 = vmatmul.mubr.bf16.gmra.mrb[0].mxu0 %v865
        %v960 = vpop.f32.mrb[0].mxu0
        %v961 = vadd.f32 0.0, %v960
        %v962 = vpop.f32.mrb[0].mxu0
        %v963 = vpop.f32.mrb[0].mxu0
        %v964 = vadd.f32 0.0, %v963
        %v965 = vpop.f32.mrb[0].mxu0
        %966 = vdwg.mxu0
        %983 = vrot.lane.b32.xlu0 %v905, 8
        %v984 = vpop.permute.xlu0 %983
        %985 = vrot.lane.b32.xlu0 %v908, 8
        %v986 = vpop.permute.xlu0 %985
        %987 = vrot.lane.b32.xlu0 %v913, 8
        %v988 = vpop.permute.xlu0 %987
        %989 = vrot.lane.b32.xlu0 %v916, 8
        %v990 = vpop.permute.xlu0 %989
        %991 = vrot.lane.b32.xlu0 %v921, 8
        %v992 = vpop.permute.xlu0 %991
        %993 = vrot.lane.b32.xlu0 %v924, 8
        %v994 = vpop.permute.xlu0 %993
        %995 = vrot.lane.b32.xlu0 %v929, 8
        %v996 = vpop.permute.xlu0 %995
        %997 = vrot.lane.b32.xlu0 %v932, 8
        %v998 = vpop.permute.xlu0 %997
        %999 = vrot.lane.b32.xlu0 %v937, 8
        %v1000 = vpop.permute.xlu0 %999
        %1001 = vrot.lane.b32.xlu0 %v940, 8
        %v1002 = vpop.permute.xlu0 %1001
        %1003 = vrot.lane.b32.xlu0 %v945, 8
        %v1004 = vpop.permute.xlu0 %1003
        %1005 = vrot.lane.b32.xlu0 %v948, 8
        %v1006 = vpop.permute.xlu0 %1005
        %1007 = vrot.lane.b32.xlu0 %v953, 8
        %v1008 = vpop.permute.xlu0 %1007
        %1009 = vrot.lane.b32.xlu0 %v956, 8
        %v1010 = vpop.permute.xlu0 %1009
        %1011 = vrot.lane.b32.xlu0 %v961, 8
        %v1012 = vpop.permute.xlu0 %1011
        %1013 = vrot.lane.b32.xlu0 %v964, 8
        %v1014 = vpop.permute.xlu0 %1013
        %vm1031 = vcmask 64512
        %v1032 = vsel %vm1031, %v741, %v984
        %v1033 = vsel %vm1031, %v744, %v986
        %v1034 = vsel %vm1031, %v749, %v988
        %v1035 = vsel %vm1031, %v752, %v990
        %v1036 = vsel %vm1031, %v757, %v992
        %v1037 = vsel %vm1031, %v760, %v994
        %v1038 = vsel %vm1031, %v765, %v996
        %v1039 = vsel %vm1031, %v768, %v998
        %v1040 = vsel %vm1031, %v773, %v1000
        %v1041 = vsel %vm1031, %v776, %v1002
        %v1042 = vsel %vm1031, %v781, %v1004
        %v1043 = vsel %vm1031, %v784, %v1006
        %v1044 = vsel %vm1031, %v789, %v1008
        %v1045 = vsel %vm1031, %v792, %v1010
        %v1046 = vsel %vm1031, %v797, %v1012
        %v1047 = vsel %vm1031, %v800, %v1014
        %v1048 = vpack.c.bf16 %v1033, %v1032
        %v1049 = vpack.c.bf16 %v1035, %v1034
        %v1050 = vpack.c.bf16 %v1037, %v1036
        %v1051 = vpack.c.bf16 %v1039, %v1038
        %v1052 = vpack.c.bf16 %v1041, %v1040
        %v1053 = vpack.c.bf16 %v1043, %v1042
        %v1054 = vpack.c.bf16 %v1045, %v1044
        %v1055 = vpack.c.bf16 %v1047, %v1046
        %v1056 = vld [vmem:[#allocation2] sm:$0xff]
        %v1057 = vld [vmem:[#allocation2 + $0x8] sm:$0xff]
        %v1058 = vld [vmem:[#allocation2 + $0x10] sm:$0xff]
        %v1059 = vld [vmem:[#allocation2 + $0x18] sm:$0xff]
        %v1060 = vld [vmem:[#allocation2 + $0x20] sm:$0xff]
        %v1061 = vld [vmem:[#allocation2 + $0x28] sm:$0xff]
        %v1062 = vld [vmem:[#allocation2 + $0x30] sm:$0xff]
        %v1063 = vld [vmem:[#allocation2 + $0x38] sm:$0xff]
        %v1064 = vld [vmem:[#allocation2 + $0x40] sm:$0xff]
        %v1065 = vld [vmem:[#allocation2 + $0x48] sm:$0xff]
        %v1066 = vld [vmem:[#allocation2 + $0x50] sm:$0xff]
        %v1067 = vld [vmem:[#allocation2 + $0x58] sm:$0xff]
        %v1068 = vld [vmem:[#allocation2 + $0x60] sm:$0xff]
        %v1069 = vld [vmem:[#allocation2 + $0x68] sm:$0xff]
        %v1070 = vld [vmem:[#allocation2 + $0x70] sm:$0xff]
        %v1071 = vld [vmem:[#allocation2 + $0x78] sm:$0xff]
        %v1072 = vld [vmem:[%s524] sm:$0xf]
        %v1073 = vld [vmem:[%s524 + $0x4] sm:$0xf]
        %v1074 = vld [vmem:[%s524 + $0x8] sm:$0xf]
        %v1075 = vld [vmem:[%s524 + $0xc] sm:$0xf]
        %v1076 = vld [vmem:[%s524 + $0x10] sm:$0xf]
        %v1077 = vld [vmem:[%s524 + $0x14] sm:$0xf]
        %v1078 = vld [vmem:[%s524 + $0x18] sm:$0xf]
        %v1079 = vld [vmem:[%s524 + $0x1c] sm:$0xf]
        %v1080 = vld [vmem:[%s524 + $0x20] sm:$0xf]
        %v1081 = vld [vmem:[%s524 + $0x24] sm:$0xf]
        %v1082 = vld [vmem:[%s524 + $0x28] sm:$0xf]
        %v1083 = vld [vmem:[%s524 + $0x2c] sm:$0xf]
        %v1084 = vld [vmem:[%s524 + $0x30] sm:$0xf]
        %v1085 = vld [vmem:[%s524 + $0x34] sm:$0xf]
        %v1086 = vld [vmem:[%s524 + $0x38] sm:$0xf]
        %v1087 = vld [vmem:[%s524 + $0x3c] sm:$0xf]
        %v1104 = vunpack.c.l.b16 %v1072
        %v1105 = vunpack.c.l.b16 %v1073
        %v1106 = vunpack.c.l.b16 %v1074
        %v1107 = vunpack.c.l.b16 %v1075
        %v1108 = vunpack.c.l.b16 %v1076
        %v1109 = vunpack.c.l.b16 %v1077
        %v1110 = vunpack.c.l.b16 %v1078
        %v1111 = vunpack.c.l.b16 %v1079
        %v1112 = vunpack.c.l.b16 %v1080
        %v1113 = vunpack.c.l.b16 %v1081
        %v1114 = vunpack.c.l.b16 %v1082
        %v1115 = vunpack.c.l.b16 %v1083
        %v1116 = vunpack.c.l.b16 %v1084
        %v1117 = vunpack.c.l.b16 %v1085
        %v1118 = vunpack.c.l.b16 %v1086
        %v1119 = vunpack.c.l.b16 %v1087
        %v1120 = vpack.c.b16 %v1105, %v1104
        %v1121 = vpack.c.b16 %v1107, %v1106
        %v1122 = vpack.c.b16 %v1109, %v1108
        %v1123 = vpack.c.b16 %v1111, %v1110
        %v1124 = vpack.c.b16 %v1113, %v1112
        %v1125 = vpack.c.b16 %v1115, %v1114
        %v1126 = vpack.c.b16 %v1117, %v1116
        %v1127 = vpack.c.b16 %v1119, %v1118
        %1136 = vmatprep.subr.bf16.mxu0 0
        %1137 = vmatpush1.bf16.msra.mxu0 %v1048
        %1138 = vmatprep.subr.bf16.mxu0 0
        %1139 = vmatpush1.bf16.msra.mxu0 %v1049
        %1140 = vmatprep.subr.bf16.mxu0 0
        %1141 = vmatpush1.bf16.msra.mxu0 %v1050
        %1142 = vmatprep.subr.bf16.mxu0 0
        %1143 = vmatpush1.bf16.msra.mxu0 %v1051
        %1144 = vmatprep.subr.bf16.mxu0 0
        %1145 = vmatpush1.bf16.msra.mxu0 %v1052
        %1146 = vmatprep.subr.bf16.mxu0 0
        %1147 = vmatpush1.bf16.msra.mxu0 %v1053
        %1148 = vmatprep.subr.bf16.mxu0 0
        %1149 = vmatpush1.bf16.msra.mxu0 %v1054
        %1150 = vmatprep.subr.bf16.mxu0 0
        %1151 = vmatpush1.bf16.msra.mxu0 %v1055
        %1152 = vmatprep.subr.bf16.mxu0 0
        %1153 = vmatpush1.bf16.msra.mxu0 0
        %1154 = vmatprep.subr.bf16.mxu0 0
        %1155 = vmatpush1.bf16.msra.mxu0 0
        %1156 = vmatprep.subr.bf16.mxu0 0
        %1157 = vmatpush1.bf16.msra.mxu0 0
        %1158 = vmatprep.subr.bf16.mxu0 0
        %1159 = vmatpush1.bf16.msra.mxu0 0
        %1160 = vmatprep.subr.bf16.mxu0 0
        %1161 = vmatpush1.bf16.msra.mxu0 0
        %1162 = vmatprep.subr.bf16.mxu0 0
        %1163 = vmatpush1.bf16.msra.mxu0 0
        %1164 = vmatprep.subr.bf16.mxu0 0
        %1165 = vmatpush1.bf16.msra.mxu0 0
        %1166 = vmatprep.subr.bf16.mxu0 0
        %1167 = vmatpush1.bf16.msra.mxu0 0
        %1168 = vmatprep.mubr.bf16.mxu0 0
        %1169 = vmatmul.mubr.bf16.gmra.mrb[0].mxu0 %v1120
        %v1170 = vpop.f32.mrb[0].mxu0
        %v1171 = vadd.f32 0.0, %v1170
        %v1172 = vpop.f32.mrb[0].mxu0
        %v1173 = vpop.f32.mrb[0].mxu0
        %v1174 = vadd.f32 0.0, %v1173
        %v1175 = vpop.f32.mrb[0].mxu0
        %1176 = vmatprep.mubr.bf16.mxu0 0
        %1177 = vmatmul.mubr.bf16.gmra.mrb[0].mxu0 %v1121
        %v1178 = vpop.f32.mrb[0].mxu0
        %v1179 = vadd.f32 0.0, %v1178
        %v1180 = vpop.f32.mrb[0].mxu0
        %v1181 = vpop.f32.mrb[0].mxu0
        %v1182 = vadd.f32 0.0, %v1181
        %v1183 = vpop.f32.mrb[0].mxu0
        %1184 = vmatprep.mubr.bf16.mxu0 0
        %1185 = vmatmul.mubr.bf16.gmra.mrb[0].mxu0 %v1122
        %v1186 = vpop.f32.mrb[0].mxu0
        %v1187 = vadd.f32 0.0, %v1186
        %v1188 = vpop.f32.mrb[0].mxu0
        %v1189 = vpop.f32.mrb[0].mxu0
        %v1190 = vadd.f32 0.0, %v1189
        %v1191 = vpop.f32.mrb[0].mxu0
        %1192 = vmatprep.mubr.bf16.mxu0 0
        %1193 = vmatmul.mubr.bf16.gmra.mrb[0].mxu0 %v1123
        %v1194 = vpop.f32.mrb[0].mxu0
        %v1195 = vadd.f32 0.0, %v1194
        %v1196 = vpop.f32.mrb[0].mxu0
        %v1197 = vpop.f32.mrb[0].mxu0
        %v1198 = vadd.f32 0.0, %v1197
        %v1199 = vpop.f32.mrb[0].mxu0
        %1200 = vmatprep.mubr.bf16.mxu0 0
        %1201 = vmatmul.mubr.bf16.gmra.mrb[0].mxu0 %v1124
        %v1202 = vpop.f32.mrb[0].mxu0
        %v1203 = vadd.f32 0.0, %v1202
        %v1204 = vpop.f32.mrb[0].mxu0
        %v1205 = vpop.f32.mrb[0].mxu0
        %v1206 = vadd.f32 0.0, %v1205
        %v1207 = vpop.f32.mrb[0].mxu0
        %1208 = vmatprep.mubr.bf16.mxu0 0
        %1209 = vmatmul.mubr.bf16.gmra.mrb[0].mxu0 %v1125
        %v1210 = vpop.f32.mrb[0].mxu0
        %v1211 = vadd.f32 0.0, %v1210
        %v1212 = vpop.f32.mrb[0].mxu0
        %v1213 = vpop.f32.mrb[0].mxu0
        %v1214 = vadd.f32 0.0, %v1213
        %v1215 = vpop.f32.mrb[0].mxu0
        %1216 = vmatprep.mubr.bf16.mxu0 0
        %1217 = vmatmul.mubr.bf16.gmra.mrb[0].mxu0 %v1126
        %v1218 = vpop.f32.mrb[0].mxu0
        %v1219 = vadd.f32 0.0, %v1218
        %v1220 = vpop.f32.mrb[0].mxu0
        %v1221 = vpop.f32.mrb[0].mxu0
        %v1222 = vadd.f32 0.0, %v1221
        %v1223 = vpop.f32.mrb[0].mxu0
        %1224 = vmatprep.mubr.bf16.mxu0 0
        %1225 = vmatmul.mubr.bf16.gmra.mrb[0].mxu0 %v1127
        %v1226 = vpop.f32.mrb[0].mxu0
        %v1227 = vadd.f32 0.0, %v1226
        %v1228 = vpop.f32.mrb[0].mxu0
        %v1229 = vpop.f32.mrb[0].mxu0
        %v1230 = vadd.f32 0.0, %v1229
        %v1231 = vpop.f32.mrb[0].mxu0
        %1232 = vdwg.mxu0
        %v1233 = vadd.f32 %v1056, %v1171
        %v1234 = vadd.f32 %v1057, %v1174
        %v1235 = vadd.f32 %v1058, %v1179
        %v1236 = vadd.f32 %v1059, %v1182
        %v1237 = vadd.f32 %v1060, %v1187
        %v1238 = vadd.f32 %v1061, %v1190
        %v1239 = vadd.f32 %v1062, %v1195
        %v1240 = vadd.f32 %v1063, %v1198
        %v1241 = vadd.f32 %v1064, %v1203
        %v1242 = vadd.f32 %v1065, %v1206
        %v1243 = vadd.f32 %v1066, %v1211
        %v1244 = vadd.f32 %v1067, %v1214
        %v1245 = vadd.f32 %v1068, %v1219
        %v1246 = vadd.f32 %v1069, %v1222
        %v1247 = vadd.f32 %v1070, %v1227
        %v1248 = vadd.f32 %v1071, %v1230
        %vm1249 = vcmask 130048
        %1250 = vst.msk [vmem:[#allocation2] sm:$0xff] %vm1249, %v1233
        %1251 = vst.msk [vmem:[#allocation2 + $0x8] sm:$0xff] %vm1249, %v1234
        %1252 = vst.msk [vmem:[#allocation2 + $0x10] sm:$0xff] %vm1249, %v1235
        %1253 = vst.msk [vmem:[#allocation2 + $0x18] sm:$0xff] %vm1249, %v1236
        %1254 = vst.msk [vmem:[#allocation2 + $0x20] sm:$0xff] %vm1249, %v1237
        %1255 = vst.msk [vmem:[#allocation2 + $0x28] sm:$0xff] %vm1249, %v1238
        %1256 = vst.msk [vmem:[#allocation2 + $0x30] sm:$0xff] %vm1249, %v1239
        %1257 = vst.msk [vmem:[#allocation2 + $0x38] sm:$0xff] %vm1249, %v1240
        %1258 = vst.msk [vmem:[#allocation2 + $0x40] sm:$0xff] %vm1249, %v1241
        %1259 = vst.msk [vmem:[#allocation2 + $0x48] sm:$0xff] %vm1249, %v1242
        %1260 = vst.msk [vmem:[#allocation2 + $0x50] sm:$0xff] %vm1249, %v1243
        %1261 = vst.msk [vmem:[#allocation2 + $0x58] sm:$0xff] %vm1249, %v1244
        %1262 = vst.msk [vmem:[#allocation2 + $0x60] sm:$0xff] %vm1249, %v1245
        %1263 = vst.msk [vmem:[#allocation2 + $0x68] sm:$0xff] %vm1249, %v1246
        %1264 = vst.msk [vmem:[#allocation2 + $0x70] sm:$0xff] %vm1249, %v1247
        %1265 = vst.msk [vmem:[#allocation2 + $0x78] sm:$0xff] %vm1249, %v1248
        %p1266 = scmp.eq.s32.totalorder %s22, 1
        // Predicated region
        $region131: #{tpu_custom_call.1} parent=117 // pred_check
          %p1267 = pneg %p1266
        $region132: #{tpu_custom_call.1} parent=117 // pred_check_branch
          %1269 = sbr.rel (%p1267) target = $region134
        $region133: #{tpu_custom_call.1} parent=117 // pred_region
          %v1270 = vld [vmem:[%s573] sm:$0xf]
          %v1271 = vld [vmem:[%s573 + $0x4] sm:$0xf]
          %v1272 = vld [vmem:[%s573 + $0x8] sm:$0xf]
          %v1273 = vld [vmem:[%s573 + $0xc] sm:$0xf]
          %v1274 = vld [vmem:[%s573 + $0x10] sm:$0xf]
          %v1275 = vld [vmem:[%s573 + $0x14] sm:$0xf]
          %v1276 = vld [vmem:[%s573 + $0x18] sm:$0xf]
          %v1277 = vld [vmem:[%s573 + $0x1c] sm:$0xf]
          %v1278 = vld [vmem:[%s573 + $0x20] sm:$0xf]
          %v1279 = vld [vmem:[%s573 + $0x24] sm:$0xf]
          %v1280 = vld [vmem:[%s573 + $0x28] sm:$0xf]
          %v1281 = vld [vmem:[%s573 + $0x2c] sm:$0xf]
          %v1282 = vld [vmem:[%s573 + $0x30] sm:$0xf]
          %v1283 = vld [vmem:[%s573 + $0x34] sm:$0xf]
          %v1284 = vld [vmem:[%s573 + $0x38] sm:$0xf]
          %v1285 = vld [vmem:[%s573 + $0x3c] sm:$0xf]
          %v1286 = vld [vmem:[%s4] sm:$0x3]
          %v1287 = vld [vmem:[%s4 + $0x2] sm:$0x3]
          %v1288 = vld [vmem:[%s5] sm:$0x1]
          %v1289 = vld [vmem:[%s5 + $0x1] sm:$0x1]
          %v1291 = vlaneseq
          %v1292 = vshrl.u32 %v1291, 7
          %v1293 = vsub.s32 0, %v1292
          %v1294 = vrot.slane %v1288, %v1293
          %v1312 = vunpack.c.l.b16 %v1270
          %v1313 = vunpack.c.l.b16 %v1271
          %v1314 = vunpack.c.l.b16 %v1272
          %v1315 = vunpack.c.l.b16 %v1273
          %v1316 = vunpack.c.l.b16 %v1274
          %v1317 = vunpack.c.l.b16 %v1275
          %v1318 = vunpack.c.l.b16 %v1276
          %v1319 = vunpack.c.l.b16 %v1277
          %v1320 = vunpack.c.l.b16 %v1278
          %v1321 = vunpack.c.l.b16 %v1279
          %v1322 = vunpack.c.l.b16 %v1280
          %v1323 = vunpack.c.l.b16 %v1281
          %v1324 = vunpack.c.l.b16 %v1282
          %v1325 = vunpack.c.l.b16 %v1283
          %v1326 = vunpack.c.l.b16 %v1284
          %v1327 = vunpack.c.l.b16 %v1285
          %v1328 = vpack.c.b16 %v1313, %v1312
          %v1329 = vpack.c.b16 %v1315, %v1314
          %v1330 = vpack.c.b16 %v1317, %v1316
          %v1331 = vpack.c.b16 %v1319, %v1318
          %v1332 = vpack.c.b16 %v1321, %v1320
          %v1333 = vpack.c.b16 %v1323, %v1322
          %v1334 = vpack.c.b16 %v1325, %v1324
          %v1335 = vpack.c.b16 %v1327, %v1326
          %v1337 = vsel %vm677, %v1328, 0
          %v1340 = vsel %vm677, %v1329, 0
          %v1343 = vsel %vm677, %v1330, 0
          %v1346 = vsel %vm677, %v1331, 0
          %v1349 = vsel %vm677, %v1332, 0
          %v1352 = vsel %vm677, %v1333, 0
          %v1355 = vsel %vm677, %v1334, 0
          %v1358 = vsel %vm677, %v1335, 0
          %v1361 = vsel %vm702, %v1286, 0
          %1363 = vmatprep.subr.bf16.mxu0 0
          %1364 = vmatpush1.bf16.msra.mxu0 %v1361
          %1365 = vmatprep.subr.bf16.mxu0 0
          %1366 = vmatpush1.bf16.msra.mxu0 0
          %1367 = vmatprep.subr.bf16.mxu0 0
          %1368 = vmatpush1.bf16.msra.mxu0 0
          %1369 = vmatprep.subr.bf16.mxu0 0
          %1370 = vmatpush1.bf16.msra.mxu0 0
          %1371 = vmatprep.subr.bf16.mxu0 0
          %1372 = vmatpush1.bf16.msra.mxu0 0
          %1373 = vmatprep.subr.bf16.mxu0 0
          %1374 = vmatpush1.bf16.msra.mxu0 0
          %1375 = vmatprep.subr.bf16.mxu0 0
          %1376 = vmatpush1.bf16.msra.mxu0 0
          %1377 = vmatprep.subr.bf16.mxu0 0
          %1378 = vmatpush1.bf16.msra.mxu0 0
          %1379 = vmatprep.subr.bf16.mxu0 0
          %1380 = vmatpush1.bf16.msra.mxu0 0
          %1381 = vmatprep.subr.bf16.mxu0 0
          %1382 = vmatpush1.bf16.msra.mxu0 0
          %1383 = vmatprep.subr.bf16.mxu0 0
          %1384 = vmatpush1.bf16.msra.mxu0 0
          %1385 = vmatprep.subr.bf16.mxu0 0
          %1386 = vmatpush1.bf16.msra.mxu0 0
          %1387 = vmatprep.subr.bf16.mxu0 0
          %1388 = vmatpush1.bf16.msra.mxu0 0
          %1389 = vmatprep.subr.bf16.mxu0 0
          %1390 = vmatpush1.bf16.msra.mxu0 0
          %1391 = vmatprep.subr.bf16.mxu0 0
          %1392 = vmatpush1.bf16.msra.mxu0 0
          %1393 = vmatprep.subr.bf16.mxu0 0
          %1394 = vmatpush1.bf16.msra.mxu0 0
          %1395 = vmatprep.mubr.bf16.mxu0 0
          %1396 = vmatmul.mubr.bf16.gmra.mrb[0].mxu0 %v1337
          %v1397 = vpop.f32.mrb[0].mxu0
          %v1398 = vadd.f32 %v1294, %v1397
          %v1399 = vpop.f32.mrb[0].mxu0
          %v1400 = vpop.f32.mrb[0].mxu0
          %v1401 = vadd.f32 %v1294, %v1400
          %v1402 = vpop.f32.mrb[0].mxu0
          %1403 = vmatprep.mubr.bf16.mxu0 0
          %1404 = vmatmul.mubr.bf16.gmra.mrb[0].mxu0 %v1340
          %v1405 = vpop.f32.mrb[0].mxu0
          %v1406 = vadd.f32 %v1294, %v1405
          %v1407 = vpop.f32.mrb[0].mxu0
          %v1408 = vpop.f32.mrb[0].mxu0
          %v1409 = vadd.f32 %v1294, %v1408
          %v1410 = vpop.f32.mrb[0].mxu0
          %1411 = vmatprep.mubr.bf16.mxu0 0
          %1412 = vmatmul.mubr.bf16.gmra.mrb[0].mxu0 %v1343
          %v1413 = vpop.f32.mrb[0].mxu0
          %v1414 = vadd.f32 %v1294, %v1413
          %v1415 = vpop.f32.mrb[0].mxu0
          %v1416 = vpop.f32.mrb[0].mxu0
          %v1417 = vadd.f32 %v1294, %v1416
          %v1418 = vpop.f32.mrb[0].mxu0
          %1419 = vmatprep.mubr.bf16.mxu0 0
          %1420 = vmatmul.mubr.bf16.gmra.mrb[0].mxu0 %v1346
          %v1421 = vpop.f32.mrb[0].mxu0
          %v1422 = vadd.f32 %v1294, %v1421
          %v1423 = vpop.f32.mrb[0].mxu0
          %v1424 = vpop.f32.mrb[0].mxu0
          %v1425 = vadd.f32 %v1294, %v1424
          %v1426 = vpop.f32.mrb[0].mxu0
          %1427 = vmatprep.mubr.bf16.mxu0 0
          %1428 = vmatmul.mubr.bf16.gmra.mrb[0].mxu0 %v1349
          %v1429 = vpop.f32.mrb[0].mxu0
          %v1430 = vadd.f32 %v1294, %v1429
          %v1431 = vpop.f32.mrb[0].mxu0
          %v1432 = vpop.f32.mrb[0].mxu0
          %v1433 = vadd.f32 %v1294, %v1432
          %v1434 = vpop.f32.mrb[0].mxu0
          %1435 = vmatprep.mubr.bf16.mxu0 0
          %1436 = vmatmul.mubr.bf16.gmra.mrb[0].mxu0 %v1352
          %v1437 = vpop.f32.mrb[0].mxu0
          %v1438 = vadd.f32 %v1294, %v1437
          %v1439 = vpop.f32.mrb[0].mxu0
          %v1440 = vpop.f32.mrb[0].mxu0
          %v1441 = vadd.f32 %v1294, %v1440
          %v1442 = vpop.f32.mrb[0].mxu0
          %1443 = vmatprep.mubr.bf16.mxu0 0
          %1444 = vmatmul.mubr.bf16.gmra.mrb[0].mxu0 %v1355
          %v1445 = vpop.f32.mrb[0].mxu0
          %v1446 = vadd.f32 %v1294, %v1445
          %v1447 = vpop.f32.mrb[0].mxu0
          %v1448 = vpop.f32.mrb[0].mxu0
          %v1449 = vadd.f32 %v1294, %v1448
          %v1450 = vpop.f32.mrb[0].mxu0
          %1451 = vmatprep.mubr.bf16.mxu0 0
          %1452 = vmatmul.mubr.bf16.gmra.mrb[0].mxu0 %v1358
          %v1453 = vpop.f32.mrb[0].mxu0
          %v1454 = vadd.f32 %v1294, %v1453
          %v1455 = vpop.f32.mrb[0].mxu0
          %v1456 = vpop.f32.mrb[0].mxu0
          %v1457 = vadd.f32 %v1294, %v1456
          %v1458 = vpop.f32.mrb[0].mxu0
          %1459 = vdwg.mxu0
          %v1461 = vlaneseq
          %v1462 = vshrl.u32 %v1461, 7
          %v1463 = vsub.s32 0, %v1462
          %v1464 = vrot.slane %v1289, %v1463
          %v1467 = vsel %vm702, %v1287, 0
          %1469 = vmatprep.subr.bf16.mxu0 0
          %1470 = vmatpush1.bf16.msra.mxu0 %v1467
          %1471 = vmatprep.subr.bf16.mxu0 0
          %1472 = vmatpush1.bf16.msra.mxu0 0
          %1473 = vmatprep.subr.bf16.mxu0 0
          %1474 = vmatpush1.bf16.msra.mxu0 0
          %1475 = vmatprep.subr.bf16.mxu0 0
          %1476 = vmatpush1.bf16.msra.mxu0 0
          %1477 = vmatprep.subr.bf16.mxu0 0
          %1478 = vmatpush1.bf16.msra.mxu0 0
          %1479 = vmatprep.subr.bf16.mxu0 0
          %1480 = vmatpush1.bf16.msra.mxu0 0
          %1481 = vmatprep.subr.bf16.mxu0 0
          %1482 = vmatpush1.bf16.msra.mxu0 0
          %1483 = vmatprep.subr.bf16.mxu0 0
          %1484 = vmatpush1.bf16.msra.mxu0 0
          %1485 = vmatprep.subr.bf16.mxu0 0
          %1486 = vmatpush1.bf16.msra.mxu0 0
          %1487 = vmatprep.subr.bf16.mxu0 0
          %1488 = vmatpush1.bf16.msra.mxu0 0
          %1489 = vmatprep.subr.bf16.mxu0 0
          %1490 = vmatpush1.bf16.msra.mxu0 0
          %1491 = vmatprep.subr.bf16.mxu0 0
          %1492 = vmatpush1.bf16.msra.mxu0 0
          %1493 = vmatprep.subr.bf16.mxu0 0
          %1494 = vmatpush1.bf16.msra.mxu0 0
          %1495 = vmatprep.subr.bf16.mxu0 0
          %1496 = vmatpush1.bf16.msra.mxu0 0
          %1497 = vmatprep.subr.bf16.mxu0 0
          %1498 = vmatpush1.bf16.msra.mxu0 0
          %1499 = vmatprep.subr.bf16.mxu0 0
          %1500 = vmatpush1.bf16.msra.mxu0 0
          %1501 = vmatprep.mubr.bf16.mxu0 0
          %1502 = vmatmul.mubr.bf16.gmra.mrb[0].mxu0 %v1337
          %v1503 = vpop.f32.mrb[0].mxu0
          %v1504 = vadd.f32 %v1464, %v1503
          %v1505 = vpop.f32.mrb[0].mxu0
          %v1506 = vpop.f32.mrb[0].mxu0
          %v1507 = vadd.f32 %v1464, %v1506
          %v1508 = vpop.f32.mrb[0].mxu0
          %1509 = vmatprep.mubr.bf16.mxu0 0
          %1510 = vmatmul.mubr.bf16.gmra.mrb[0].mxu0 %v1340
          %v1511 = vpop.f32.mrb[0].mxu0
          %v1512 = vadd.f32 %v1464, %v1511
          %v1513 = vpop.f32.mrb[0].mxu0
          %v1514 = vpop.f32.mrb[0].mxu0
          %v1515 = vadd.f32 %v1464, %v1514
          %v1516 = vpop.f32.mrb[0].mxu0
          %1517 = vmatprep.mubr.bf16.mxu0 0
          %1518 = vmatmul.mubr.bf16.gmra.mrb[0].mxu0 %v1343
          %v1519 = vpop.f32.mrb[0].mxu0
          %v1520 = vadd.f32 %v1464, %v1519
          %v1521 = vpop.f32.mrb[0].mxu0
          %v1522 = vpop.f32.mrb[0].mxu0
          %v1523 = vadd.f32 %v1464, %v1522
          %v1524 = vpop.f32.mrb[0].mxu0
          %1525 = vmatprep.mubr.bf16.mxu0 0
          %1526 = vmatmul.mubr.bf16.gmra.mrb[0].mxu0 %v1346
          %v1527 = vpop.f32.mrb[0].mxu0
          %v1528 = vadd.f32 %v1464, %v1527
          %v1529 = vpop.f32.mrb[0].mxu0
          %v1530 = vpop.f32.mrb[0].mxu0
          %v1531 = vadd.f32 %v1464, %v1530
          %v1532 = vpop.f32.mrb[0].mxu0
          %1533 = vmatprep.mubr.bf16.mxu0 0
          %1534 = vmatmul.mubr.bf16.gmra.mrb[0].mxu0 %v1349
          %v1535 = vpop.f32.mrb[0].mxu0
          %v1536 = vadd.f32 %v1464, %v1535
          %v1537 = vpop.f32.mrb[0].mxu0
          %v1538 = vpop.f32.mrb[0].mxu0
          %v1539 = vadd.f32 %v1464, %v1538
          %v1540 = vpop.f32.mrb[0].mxu0
          %1541 = vmatprep.mubr.bf16.mxu0 0
          %1542 = vmatmul.mubr.bf16.gmra.mrb[0].mxu0 %v1352
          %v1543 = vpop.f32.mrb[0].mxu0
          %v1544 = vadd.f32 %v1464, %v1543
          %v1545 = vpop.f32.mrb[0].mxu0
          %v1546 = vpop.f32.mrb[0].mxu0
          %v1547 = vadd.f32 %v1464, %v1546
          %v1548 = vpop.f32.mrb[0].mxu0
          %1549 = vmatprep.mubr.bf16.mxu0 0
          %1550 = vmatmul.mubr.bf16.gmra.mrb[0].mxu0 %v1355
          %v1551 = vpop.f32.mrb[0].mxu0
          %v1552 = vadd.f32 %v1464, %v1551
          %v1553 = vpop.f32.mrb[0].mxu0
          %v1554 = vpop.f32.mrb[0].mxu0
          %v1555 = vadd.f32 %v1464, %v1554
          %v1556 = vpop.f32.mrb[0].mxu0
          %1557 = vmatprep.mubr.bf16.mxu0 0
          %1558 = vmatmul.mubr.bf16.gmra.mrb[0].mxu0 %v1358
          %v1559 = vpop.f32.mrb[0].mxu0
          %v1560 = vadd.f32 %v1464, %v1559
          %v1561 = vpop.f32.mrb[0].mxu0
          %v1562 = vpop.f32.mrb[0].mxu0
          %v1563 = vadd.f32 %v1464, %v1562
          %v1564 = vpop.f32.mrb[0].mxu0
          %1565 = vdwg.mxu0
          %1582 = vrot.lane.b32.xlu0 %v1504, 8
          %v1583 = vpop.permute.xlu0 %1582
          %1584 = vrot.lane.b32.xlu0 %v1507, 8
          %v1585 = vpop.permute.xlu0 %1584
          %1586 = vrot.lane.b32.xlu0 %v1512, 8
          %v1587 = vpop.permute.xlu0 %1586
          %1588 = vrot.lane.b32.xlu0 %v1515, 8
          %v1589 = vpop.permute.xlu0 %1588
          %1590 = vrot.lane.b32.xlu0 %v1520, 8
          %v1591 = vpop.permute.xlu0 %1590
          %1592 = vrot.lane.b32.xlu0 %v1523, 8
          %v1593 = vpop.permute.xlu0 %1592
          %1594 = vrot.lane.b32.xlu0 %v1528, 8
          %v1595 = vpop.permute.xlu0 %1594
          %1596 = vrot.lane.b32.xlu0 %v1531, 8
          %v1597 = vpop.permute.xlu0 %1596
          %1598 = vrot.lane.b32.xlu0 %v1536, 8
          %v1599 = vpop.permute.xlu0 %1598
          %1600 = vrot.lane.b32.xlu0 %v1539, 8
          %v1601 = vpop.permute.xlu0 %1600
          %1602 = vrot.lane.b32.xlu0 %v1544, 8
          %v1603 = vpop.permute.xlu0 %1602
          %1604 = vrot.lane.b32.xlu0 %v1547, 8
          %v1605 = vpop.permute.xlu0 %1604
          %1606 = vrot.lane.b32.xlu0 %v1552, 8
          %v1607 = vpop.permute.xlu0 %1606
          %1608 = vrot.lane.b32.xlu0 %v1555, 8
          %v1609 = vpop.permute.xlu0 %1608
          %1610 = vrot.lane.b32.xlu0 %v1560, 8
          %v1611 = vpop.permute.xlu0 %1610
          %1612 = vrot.lane.b32.xlu0 %v1563, 8
          %v1613 = vpop.permute.xlu0 %1612
          %v1630 = vsel %vm1031, %v1398, %v1583
          %v1631 = vsel %vm1031, %v1401, %v1585
          %v1632 = vsel %vm1031, %v1406, %v1587
          %v1633 = vsel %vm1031, %v1409, %v1589
          %v1634 = vsel %vm1031, %v1414, %v1591
          %v1635 = vsel %vm1031, %v1417, %v1593
          %v1636 = vsel %vm1031, %v1422, %v1595
          %v1637 = vsel %vm1031, %v1425, %v1597
          %v1638 = vsel %vm1031, %v1430, %v1599
          %v1639 = vsel %vm1031, %v1433, %v1601
          %v1640 = vsel %vm1031, %v1438, %v1603
          %v1641 = vsel %vm1031, %v1441, %v1605
          %v1642 = vsel %vm1031, %v1446, %v1607
          %v1643 = vsel %vm1031, %v1449, %v1609
          %v1644 = vsel %vm1031, %v1454, %v1611
          %v1645 = vsel %vm1031, %v1457, %v1613
          %v1646 = vld [vmem:[#allocation2] sm:$0xff]
          %v1647 = vld [vmem:[#allocation2 + $0x8] sm:$0xff]
          %v1648 = vld [vmem:[#allocation2 + $0x10] sm:$0xff]
          %v1649 = vld [vmem:[#allocation2 + $0x18] sm:$0xff]
          %v1650 = vld [vmem:[#allocation2 + $0x20] sm:$0xff]
          %v1651 = vld [vmem:[#allocation2 + $0x28] sm:$0xff]
          %v1652 = vld [vmem:[#allocation2 + $0x30] sm:$0xff]
          %v1653 = vld [vmem:[#allocation2 + $0x38] sm:$0xff]
          %v1654 = vld [vmem:[#allocation2 + $0x40] sm:$0xff]
          %v1655 = vld [vmem:[#allocation2 + $0x48] sm:$0xff]
          %v1656 = vld [vmem:[#allocation2 + $0x50] sm:$0xff]
          %v1657 = vld [vmem:[#allocation2 + $0x58] sm:$0xff]
          %v1658 = vld [vmem:[#allocation2 + $0x60] sm:$0xff]
          %v1659 = vld [vmem:[#allocation2 + $0x68] sm:$0xff]
          %v1660 = vld [vmem:[#allocation2 + $0x70] sm:$0xff]
          %v1661 = vld [vmem:[#allocation2 + $0x78] sm:$0xff]
          %v1662 = vadd.f32 %v1646, %v1630
          %v1663 = vadd.f32 %v1647, %v1631
          %v1664 = vadd.f32 %v1648, %v1632
          %v1665 = vadd.f32 %v1649, %v1633
          %v1666 = vadd.f32 %v1650, %v1634
          %v1667 = vadd.f32 %v1651, %v1635
          %v1668 = vadd.f32 %v1652, %v1636
          %v1669 = vadd.f32 %v1653, %v1637
          %v1670 = vadd.f32 %v1654, %v1638
          %v1671 = vadd.f32 %v1655, %v1639
          %v1672 = vadd.f32 %v1656, %v1640
          %v1673 = vadd.f32 %v1657, %v1641
          %v1674 = vadd.f32 %v1658, %v1642
          %v1675 = vadd.f32 %v1659, %v1643
          %v1676 = vadd.f32 %v1660, %v1644
          %v1677 = vadd.f32 %v1661, %v1645
          %v1678 = vmax.f32 %v1662, 0.0
          %v1679 = vmax.f32 %v1663, 0.0
          %v1680 = vmax.f32 %v1664, 0.0
          %v1681 = vmax.f32 %v1665, 0.0
          %v1682 = vmax.f32 %v1666, 0.0
          %v1683 = vmax.f32 %v1667, 0.0
          %v1684 = vmax.f32 %v1668, 0.0
          %v1685 = vmax.f32 %v1669, 0.0
          %v1686 = vmax.f32 %v1670, 0.0
          %v1687 = vmax.f32 %v1671, 0.0
          %v1688 = vmax.f32 %v1672, 0.0
          %v1689 = vmax.f32 %v1673, 0.0
          %v1690 = vmax.f32 %v1674, 0.0
          %v1691 = vmax.f32 %v1675, 0.0
          %v1692 = vmax.f32 %v1676, 0.0
          %v1693 = vmax.f32 %v1677, 0.0
          %1694 = vst.msk [vmem:[%s579] sm:$0xff] %vm1249, %v1678
          %1695 = vst.msk [vmem:[%s579 + $0x8] sm:$0xff] %vm1249, %v1679
          %1696 = vst.msk [vmem:[%s579 + $0x10] sm:$0xff] %vm1249, %v1680
          %1697 = vst.msk [vmem:[%s579 + $0x18] sm:$0xff] %vm1249, %v1681
          %1698 = vst.msk [vmem:[%s579 + $0x20] sm:$0xff] %vm1249, %v1682
          %1699 = vst.msk [vmem:[%s579 + $0x28] sm:$0xff] %vm1249, %v1683
          %1700 = vst.msk [vmem:[%s579 + $0x30] sm:$0xff] %vm1249, %v1684
          %1701 = vst.msk [vmem:[%s579 + $0x38] sm:$0xff] %vm1249, %v1685
          %1702 = vst.msk [vmem:[%s579 + $0x40] sm:$0xff] %vm1249, %v1686
          %1703 = vst.msk [vmem:[%s579 + $0x48] sm:$0xff] %vm1249, %v1687
          %1704 = vst.msk [vmem:[%s579 + $0x50] sm:$0xff] %vm1249, %v1688
          %1705 = vst.msk [vmem:[%s579 + $0x58] sm:$0xff] %vm1249, %v1689
          %1706 = vst.msk [vmem:[%s579 + $0x60] sm:$0xff] %vm1249, %v1690
          %1707 = vst.msk [vmem:[%s579 + $0x68] sm:$0xff] %vm1249, %v1691
          %1708 = vst.msk [vmem:[%s579 + $0x70] sm:$0xff] %vm1249, %v1692
          %1709 = vst.msk [vmem:[%s579 + $0x78] sm:$0xff] %vm1249, %v1693
        $region134: #{tpu_custom_call.1} parent=117 // pred_fallthru
          _
        %s1710 = smul.u32 16, %s21
        %p1711 = scmp.lt.s32.totalorder %s1710, 31
        %s1712 = scalar_select %p1711, %s1710, 31
        %s1713 = smul.addr %s1712, 8
        %s1714 = scalar_lea.vmem %s6, %s1713
        // Predicated region
        $region135: #{tpu_custom_call.1} parent=117 // pred_check
          %p1715 = pneg %p190
        $region136: #{tpu_custom_call.1} parent=117 // pred_check_branch
          %1717 = sbr.rel (%p1715) target = $region138
        $region137: #{tpu_custom_call.1} parent=117 // pred_region
          %s1718 = smul.u32 16, %s21
        $region138: #{tpu_custom_call.1} parent=117 // pred_fallthru
          _
      $region118: #{tpu_custom_call.1} parent=5 // pred_fallthru
        _
      %p1719 = scmp.le.s32.totalorder 2, %s12
      // Predicated region
      $region139: #{tpu_custom_call.1} parent=5 // pred_check
        %p1720 = pneg %p1719
      $region140: #{tpu_custom_call.1} parent=5 // pred_check_branch
        %1722 = sbr.rel (%p1720) target = $region142
      $region141: #{tpu_custom_call.1} parent=5 // pred_region
        %s1723 = ssub.s32 %s12, 2
        // Predicated region
        $region143: #{tpu_custom_call.1} parent=141 // pred_check
          %p1724 = pneg %p196
        $region144: #{tpu_custom_call.1} parent=141 // pred_check_branch
          %1726 = sbr.rel (%p1724) target = $region146
        $region145: #{tpu_custom_call.1} parent=141 // pred_region
          %s1727 = smul.u32 16, %s23
          %p1728 = scmp.lt.s32.totalorder %s1727, 31
          %s1729 = scalar_select %p1728, %s1727, 31
          %s1730 = smul.addr %s1729, 8
          %s1731 = scalar_lea.vmem %s6, %s1730
        $region146: #{tpu_custom_call.1} parent=141 // pred_fallthru
          _
      $region142: #{tpu_custom_call.1} parent=5 // pred_fallthru
        _
    $region6: #{tpu_custom_call.1} parent=1 // loop_footer
      %s16 = sadd.s32 1, %s12
    $region7: #{tpu_custom_call.1} parent=1 // loop_footer_branch
      %11 = sbr.rel target = $region3
    $region8: #{tpu_custom_call.1} parent=1 // loop_exit
      _

</llo_original>
